<compile_context>
chip_gen: v6e
topology: v6e:2x2x1
jax: 0.10.0
libtpu: 0.0.40
codegen_flags: <defaults>
</compile_context>

<pallas_src>
import functools

import jax
import jax.numpy as jnp
from jax.experimental import pallas as pl
from jax.experimental.pallas import tpu as pltpu

BN_EPS = 1e-5
NORM_EPS = 1e-12


def _vmem():
    return pl.BlockSpec(memory_space=pltpu.MemorySpace.VMEM)


# --------------------------- in-kernel helpers -----------------------------
def _mm(x, w):
    """MXU matmul: bf16 operands, f32 accumulation."""
    return jnp.dot(x.astype(jnp.bfloat16), w.astype(jnp.bfloat16),
                   preferred_element_type=jnp.float32)


def _bn_two_view(x, batch, gamma=None, beta=None):
    """Train-mode BatchNorm1d on (2*batch, F).

    Batch statistics (biased variance, as PyTorch uses in the forward pass)
    are computed separately for rows [0:batch) and [batch:2*batch) so the two
    augmented views keep independent BN stats, matching the reference where
    each view goes through the encoder in a separate call.
    """
    x0, x1 = x[:batch], x[batch:]
    mu0 = jnp.mean(x0, axis=0, keepdims=True)
    mu1 = jnp.mean(x1, axis=0, keepdims=True)
    var0 = jnp.mean((x0 - mu0) ** 2, axis=0, keepdims=True)
    var1 = jnp.mean((x1 - mu1) ** 2, axis=0, keepdims=True)
    rows = jax.lax.broadcasted_iota(jnp.int32, (x.shape[0], 1), 0)
    in_view1 = rows >= batch
    mu = jnp.where(in_view1, mu1, mu0)
    inv = jnp.where(in_view1, jax.lax.rsqrt(var1 + BN_EPS),
                    jax.lax.rsqrt(var0 + BN_EPS))
    y = (x - mu) * inv
    if gamma is not None:
        y = y * gamma + beta
    return y


def _encoder_core(pooled, wpe, bpe, w1, g1, b1, w2, batch):
    # Patch embed: pooling already applied (mean commutes with the linear map
    # and the patch-invariant bias), so a single (2B, K) @ (K, E) matmul.
    feats = _mm(pooled, wpe) + bpe                                   # (2B, E)
    # Linear(no bias) -> BN(affine) -> ReLU -> Linear(no bias) -> BN(no affine)
    h = _mm(feats, w1)                                               # (2B, H)
    h = jnp.maximum(_bn_two_view(h, batch, g1, b1), 0.0)
    z = _mm(h, w2)                                                   # (2B, D)
    return _bn_two_view(z, batch)


# ------------------------------- kernels -----------------------------------
def _q_fused_kernel(p_ref, wpe_ref, bpe_ref, w1_ref, g1_ref, b1_ref, w2_ref,
                    pw1_ref, pg1_ref, pb1_ref, pw2_ref, o_ref):
    batch = p_ref.shape[0] // 2
    # Mean pooling over patches BEFORE the patch-embed matmul (exact commute).
    pooled = jnp.mean(p_ref[...], axis=1)                            # (2B, K)
    z = _encoder_core(pooled, wpe_ref[...], bpe_ref[...], w1_ref[...],
                      g1_ref[...], b1_ref[...], w2_ref[...], batch)
    # Predictor: Linear(no bias) -> BN(affine) -> ReLU -> Linear(no bias).
    h = _mm(z, pw1_ref[...])
    h = jnp.maximum(_bn_two_view(h, batch, pg1_ref[...], pb1_ref[...]), 0.0)
    o_ref[...] = _mm(h, pw2_ref[...])                                # (2B, D)


def _k_fused_kernel(p_ref, wpe_ref, bpe_ref, w1_ref, g1_ref, b1_ref, w2_ref,
                    o_ref):
    batch = p_ref.shape[0] // 2
    pooled = jnp.mean(p_ref[...], axis=1)                            # (2B, K)
    o_ref[...] = _encoder_core(pooled, wpe_ref[...], bpe_ref[...],
                               w1_ref[...], g1_ref[...], b1_ref[...],
                               w2_ref[...], batch)


def _loss_pair_kernel(q_ref, k_ref, o_ref, *, temp):
    batch = q_ref.shape[0] // 2
    inv_temp = 1.0 / temp

    def one_loss(q, k):
        # F.normalize(dim=1): x / max(||x||, eps) == x * rsqrt(max(ss, eps^2))
        qn = q * jax.lax.rsqrt(
            jnp.maximum(jnp.sum(q * q, axis=1, keepdims=True),
                        NORM_EPS * NORM_EPS))
        kn = k * jax.lax.rsqrt(
            jnp.maximum(jnp.sum(k * k, axis=1, keepdims=True),
                        NORM_EPS * NORM_EPS))
        # Contract both operands on the feature axis (no explicit transpose).
        logits = jax.lax.dot_general(
            qn, kn, (((1,), (1,)), ((), ())),
            preferred_element_type=jnp.float32) * inv_temp           # (N, N)
        m = jnp.max(logits, axis=1, keepdims=True)
        lse = m[:, 0] + jnp.log(jnp.sum(jnp.exp(logits - m), axis=1))
        # Diagonal of logits computed directly from the normalized vectors.
        diag = jnp.sum(qn * kn, axis=1) * inv_temp
        return jnp.mean(lse - diag) * (2.0 * temp)

    q = q_ref[...]
    k = k_ref[...]
    q1, q2 = q[:batch], q[batch:]
    k1, k2 = k[:batch], k[batch:]
    o_ref[...] = (one_loss(q1, k2) + one_loss(q2, k1)).reshape(1, 1)


# ------------------------------- wrappers ----------------------------------
def encode_and_predict(patches, enc, pred):
    vb = patches.shape[0]
    out_dim = pred["w2"].shape[1]
    return pl.pallas_call(
        _q_fused_kernel,
        out_shape=jax.ShapeDtypeStruct((vb, out_dim), jnp.float32),
        in_specs=[_vmem()] * 11,
        out_specs=_vmem(),
    )(patches, enc["w_pe"], enc["b_pe"], enc["w1"], enc["g1"], enc["b1"],
      enc["w2"], pred["w1"], pred["g1"], pred["b1"], pred["w2"])


def encode(patches, enc):
    vb = patches.shape[0]
    out_dim = enc["w2"].shape[1]
    return pl.pallas_call(
        _k_fused_kernel,
        out_shape=jax.ShapeDtypeStruct((vb, out_dim), jnp.float32),
        in_specs=[_vmem()] * 7,
        out_specs=_vmem(),
    )(patches, enc["w_pe"], enc["b_pe"], enc["w1"], enc["g1"], enc["b1"],
      enc["w2"])


def contrastive_loss_pair(q, k, temp):
    return pl.pallas_call(
        functools.partial(_loss_pair_kernel, temp=temp),
        out_shape=jax.ShapeDtypeStruct((1, 1), jnp.float32),
        in_specs=[_vmem(), _vmem()],
        out_specs=_vmem(),
    )(q, k)[0, 0]


# ---------------------------------- glue ------------------------------------
def extract_patches(x, patch):
    # x: (B, C, H, W) -> (B, P, C*patch*patch), matching Conv2d weight
    # flattening order (out_ch, in_ch, kh, kw).
    B, C, H, W = x.shape
    gh, gw = H // patch, W // patch
    x = x.reshape(B, C, gh, patch, gw, patch)
    x = jnp.transpose(x, (0, 2, 4, 1, 3, 5))          # (B, gh, gw, C, ph, pw)
    return x.reshape(B, gh * gw, C * patch * patch)


def init_params(key, in_ch, patch, embed, hidden, dim):
    ks = jax.random.split(key, 6)
    s = 0.02
    K = in_ch * patch * patch
    q_params = {
        "w_pe": jax.random.normal(ks[0], (K, embed), jnp.float32) * s,
        "b_pe": jnp.zeros((1, embed), jnp.float32),
        "w1": jax.random.normal(ks[1], (embed, hidden), jnp.float32) * s,
        "g1": jnp.ones((1, hidden), jnp.float32),
        "b1": jnp.zeros((1, hidden), jnp.float32),
        "w2": jax.random.normal(ks[2], (hidden, dim), jnp.float32) * s,
    }
    # k encoder starts as an exact copy of q (param_k.data.copy_(param_q.data))
    k_params = dict(q_params)
    pred_params = {
        "w1": jax.random.normal(ks[3], (dim, hidden), jnp.float32) * s,
        "g1": jnp.ones((1, hidden), jnp.float32),
        "b1": jnp.zeros((1, hidden), jnp.float32),
        "w2": jax.random.normal(ks[4], (hidden, dim), jnp.float32) * s,  # bias=False
    }
    return q_params, k_params, pred_params


def forward(x1, x2, moco_m, q_params, k_params, pred_params, temp, patch):
    # Both views packed along the batch axis: rows [0:B] = view 1, [B:2B] = view 2.
    patches = jnp.concatenate(
        [extract_patches(x1, patch), extract_patches(x2, patch)], axis=0)

    # q branch + predictor: one fused kernel for both views -> [q1; q2]
    q_out = encode_and_predict(patches, q_params, pred_params)

    # Momentum EMA of the key encoder (no grad).
    # TODO(synk): at real ViT-S parameter counts, do this in a Pallas kernel
    #   with input_output_aliases so k params are updated in place (no extra
    #   HBM allocation); trivial at these toy sizes.
    k_params = jax.tree_util.tree_map(
        lambda kp, qp: kp * moco_m + qp * (1.0 - moco_m), k_params, q_params)

    # k branch: one fused kernel for both views -> [k1; k2]
    k_out = encode(patches, k_params)

    # contrastive_loss(q1, k2) + contrastive_loss(q2, k1), one kernel launch.
    return contrastive_loss_pair(q_out, k_out, temp)


if __name__ == "__main__":
    # Small shapes consistent with the module: NCHW images, patch=16 (ViT
    # patch size), feature dims kept lane-sized (multiples of 128); 2*B = 16
    # rows per fused call (bf16-friendly sublane tile).
    B, C, H, W = 8, 3, 32, 32
    PATCH, EMBED, HIDDEN, DIM = 16, 128, 128, 128
    TEMP, MOCO_M = 0.1, 0.99

    key = jax.random.PRNGKey(0)
    kx1, kx2, kp = jax.random.split(key, 3)
    x1 = jax.random.normal(kx1, (B, C, H, W), jnp.float32)
    x2 = jax.random.normal(kx2, (B, C, H, W), jnp.float32)

    q_params, k_params, pred_params = init_params(kp, C, PATCH, EMBED, HIDDEN, DIM)

    loss = forward(x1, x2, MOCO_M, q_params, k_params, pred_params, TEMP, PATCH)
    jax.block_until_ready(loss)
    assert loss.shape == () and jnp.isfinite(loss)
    print("KERNEL_OK")
</pallas_src>

<mosaic_0001>
module attributes {stable_mosaic.version = 11 : i64} {
  func.func @_q_fused_kernel(%arg0: memref<16x4x768xf32, #tpu.memory_space<vmem>>, %arg1: memref<768x128xf32, #tpu.memory_space<vmem>>, %arg2: memref<1x128xf32, #tpu.memory_space<vmem>>, %arg3: memref<128x128xf32, #tpu.memory_space<vmem>>, %arg4: memref<1x128xf32, #tpu.memory_space<vmem>>, %arg5: memref<1x128xf32, #tpu.memory_space<vmem>>, %arg6: memref<128x128xf32, #tpu.memory_space<vmem>>, %arg7: memref<128x128xf32, #tpu.memory_space<vmem>>, %arg8: memref<1x128xf32, #tpu.memory_space<vmem>>, %arg9: memref<1x128xf32, #tpu.memory_space<vmem>>, %arg10: memref<128x128xf32, #tpu.memory_space<vmem>>, %arg11: memref<16x128xf32, #tpu.memory_space<vmem>>) attributes {dimension_semantics = [], scalar_prefetch = 0 : i64, scratch_operands = 0 : i64, tpu.core_type = #tpu.core_type<tc>} {
    %c0 = arith.constant 0 : index
    %c0_0 = arith.constant 0 : index
    %c0_1 = arith.constant 0 : index
    %0 = vector.load %arg0[%c0, %c0_0, %c0_1] : memref<16x4x768xf32, #tpu.memory_space<vmem>>, vector<16x4x768xf32>
    %cst = arith.constant dense<0.000000e+00> : vector<16x768xf32>
    %1 = vector.multi_reduction <add>, %0, %cst [1] : vector<16x4x768xf32> to vector<16x768xf32>
    %cst_2 = arith.constant 4.000000e+00 : f32
    %2 = vector.broadcast %cst_2 : f32 to vector<16x768xf32>
    %3 = arith.divf %1, %2 : vector<16x768xf32>
    %c0_3 = arith.constant 0 : index
    %c0_4 = arith.constant 0 : index
    %4 = vector.load %arg1[%c0_3, %c0_4] : memref<768x128xf32, #tpu.memory_space<vmem>>, vector<768x128xf32>
    %c0_5 = arith.constant 0 : index
    %c0_6 = arith.constant 0 : index
    %5 = vector.load %arg2[%c0_5, %c0_6] : memref<1x128xf32, #tpu.memory_space<vmem>>, vector<1x128xf32>
    %c0_7 = arith.constant 0 : index
    %c0_8 = arith.constant 0 : index
    %6 = vector.load %arg3[%c0_7, %c0_8] : memref<128x128xf32, #tpu.memory_space<vmem>>, vector<128x128xf32>
    %c0_9 = arith.constant 0 : index
    %c0_10 = arith.constant 0 : index
    %7 = vector.load %arg4[%c0_9, %c0_10] : memref<1x128xf32, #tpu.memory_space<vmem>>, vector<1x128xf32>
    %c0_11 = arith.constant 0 : index
    %c0_12 = arith.constant 0 : index
    %8 = vector.load %arg5[%c0_11, %c0_12] : memref<1x128xf32, #tpu.memory_space<vmem>>, vector<1x128xf32>
    %c0_13 = arith.constant 0 : index
    %c0_14 = arith.constant 0 : index
    %9 = vector.load %arg6[%c0_13, %c0_14] : memref<128x128xf32, #tpu.memory_space<vmem>>, vector<128x128xf32>
    %10 = arith.truncf %3 : vector<16x768xf32> to vector<16x768xbf16>
    %11 = arith.truncf %4 : vector<768x128xf32> to vector<768x128xbf16>
    %cst_15 = arith.constant dense<0.000000e+00> : vector<16x128xf32>
    %12 = tpu.matmul %10, %11, %cst_15 {dimension_numbers = #tpu.dot_dimension_numbers<[1], [0], [0], [1], [0, 0, 1, 1], [], []>} : vector<16x768xbf16>, vector<768x128xbf16>, vector<16x128xf32> -> vector<16x128xf32>
    %13 = vector.broadcast %5 : vector<1x128xf32> to vector<16x128xf32>
    %14 = arith.addf %12, %13 : vector<16x128xf32>
    %15 = arith.truncf %14 : vector<16x128xf32> to vector<16x128xbf16>
    %16 = arith.truncf %6 : vector<128x128xf32> to vector<128x128xbf16>
    %cst_16 = arith.constant dense<0.000000e+00> : vector<16x128xf32>
    %17 = tpu.matmul %15, %16, %cst_16 {dimension_numbers = #tpu.dot_dimension_numbers<[1], [0], [0], [1], [0, 0, 1, 1], [], []>} : vector<16x128xbf16>, vector<128x128xbf16>, vector<16x128xf32> -> vector<16x128xf32>
    %18 = vector.extract_strided_slice %17 {offsets = [0, 0], sizes = [8, 128], strides = [1, 1]} : vector<16x128xf32> to vector<8x128xf32>
    %19 = vector.extract_strided_slice %17 {offsets = [8, 0], sizes = [8, 128], strides = [1, 1]} : vector<16x128xf32> to vector<8x128xf32>
    %cst_17 = arith.constant dense<0.000000e+00> : vector<128xf32>
    %20 = vector.multi_reduction <add>, %18, %cst_17 [0] : vector<8x128xf32> to vector<128xf32>
    %21 = vector.shape_cast %20 : vector<128xf32> to vector<1x128xf32>
    %cst_18 = arith.constant 8.000000e+00 : f32
    %22 = vector.broadcast %cst_18 : f32 to vector<1x128xf32>
    %23 = arith.divf %21, %22 : vector<1x128xf32>
    %cst_19 = arith.constant dense<0.000000e+00> : vector<128xf32>
    %24 = vector.multi_reduction <add>, %19, %cst_19 [0] : vector<8x128xf32> to vector<128xf32>
    %25 = vector.shape_cast %24 : vector<128xf32> to vector<1x128xf32>
    %cst_20 = arith.constant 8.000000e+00 : f32
    %26 = vector.broadcast %cst_20 : f32 to vector<1x128xf32>
    %27 = arith.divf %25, %26 : vector<1x128xf32>
    %28 = vector.broadcast %23 : vector<1x128xf32> to vector<8x128xf32>
    %29 = arith.subf %18, %28 : vector<8x128xf32>
    %30 = arith.mulf %29, %29 : vector<8x128xf32>
    %cst_21 = arith.constant dense<0.000000e+00> : vector<128xf32>
    %31 = vector.multi_reduction <add>, %30, %cst_21 [0] : vector<8x128xf32> to vector<128xf32>
    %32 = vector.shape_cast %31 : vector<128xf32> to vector<1x128xf32>
    %cst_22 = arith.constant 8.000000e+00 : f32
    %33 = vector.broadcast %cst_22 : f32 to vector<1x128xf32>
    %34 = arith.divf %32, %33 : vector<1x128xf32>
    %35 = vector.broadcast %27 : vector<1x128xf32> to vector<8x128xf32>
    %36 = arith.subf %19, %35 : vector<8x128xf32>
    %37 = arith.mulf %36, %36 : vector<8x128xf32>
    %cst_23 = arith.constant dense<0.000000e+00> : vector<128xf32>
    %38 = vector.multi_reduction <add>, %37, %cst_23 [0] : vector<8x128xf32> to vector<128xf32>
    %39 = vector.shape_cast %38 : vector<128xf32> to vector<1x128xf32>
    %cst_24 = arith.constant 8.000000e+00 : f32
    %40 = vector.broadcast %cst_24 : f32 to vector<1x128xf32>
    %41 = arith.divf %39, %40 : vector<1x128xf32>
    %42 = tpu.iota {dimensions = array<i32: 0>} : vector<16x1xi32>
    %c8_i32 = arith.constant 8 : i32
    %43 = vector.broadcast %c8_i32 : i32 to vector<16x1xi32>
    %44 = arith.cmpi sge, %42, %43 : vector<16x1xi32>
    %45 = vector.shape_cast %44 : vector<16x1xi1> to vector<16x1xi1>
    %46 = vector.broadcast %45 : vector<16x1xi1> to vector<16x128xi1>
    %47 = vector.shape_cast %27 : vector<1x128xf32> to vector<1x128xf32>
    %48 = vector.broadcast %47 : vector<1x128xf32> to vector<16x128xf32>
    %49 = vector.shape_cast %23 : vector<1x128xf32> to vector<1x128xf32>
    %50 = vector.broadcast %49 : vector<1x128xf32> to vector<16x128xf32>
    %51 = arith.select %46, %48, %50 : vector<16x128xi1>, vector<16x128xf32>
    %cst_25 = arith.constant 9.99999974E-6 : f32
    %52 = vector.broadcast %cst_25 : f32 to vector<1x128xf32>
    %53 = arith.addf %41, %52 : vector<1x128xf32>
    %54 = math.rsqrt %53 : vector<1x128xf32>
    %cst_26 = arith.constant 9.99999974E-6 : f32
    %55 = vector.broadcast %cst_26 : f32 to vector<1x128xf32>
    %56 = arith.addf %34, %55 : vector<1x128xf32>
    %57 = math.rsqrt %56 : vector<1x128xf32>
    %58 = vector.shape_cast %44 : vector<16x1xi1> to vector<16x1xi1>
    %59 = vector.broadcast %58 : vector<16x1xi1> to vector<16x128xi1>
    %60 = vector.shape_cast %54 : vector<1x128xf32> to vector<1x128xf32>
    %61 = vector.broadcast %60 : vector<1x128xf32> to vector<16x128xf32>
    %62 = vector.shape_cast %57 : vector<1x128xf32> to vector<1x128xf32>
    %63 = vector.broadcast %62 : vector<1x128xf32> to vector<16x128xf32>
    %64 = arith.select %59, %61, %63 : vector<16x128xi1>, vector<16x128xf32>
    %65 = arith.subf %17, %51 : vector<16x128xf32>
    %66 = arith.mulf %65, %64 : vector<16x128xf32>
    %67 = vector.broadcast %7 : vector<1x128xf32> to vector<16x128xf32>
    %68 = arith.mulf %66, %67 : vector<16x128xf32>
    %69 = vector.broadcast %8 : vector<1x128xf32> to vector<16x128xf32>
    %70 = arith.addf %68, %69 : vector<16x128xf32>
    %cst_27 = arith.constant 0.000000e+00 : f32
    %71 = vector.broadcast %cst_27 : f32 to vector<16x128xf32>
    %72 = arith.maximumf %70, %71 : vector<16x128xf32>
    %73 = arith.truncf %72 : vector<16x128xf32> to vector<16x128xbf16>
    %74 = arith.truncf %9 : vector<128x128xf32> to vector<128x128xbf16>
    %cst_28 = arith.constant dense<0.000000e+00> : vector<16x128xf32>
    %75 = tpu.matmul %73, %74, %cst_28 {dimension_numbers = #tpu.dot_dimension_numbers<[1], [0], [0], [1], [0, 0, 1, 1], [], []>} : vector<16x128xbf16>, vector<128x128xbf16>, vector<16x128xf32> -> vector<16x128xf32>
    %76 = vector.extract_strided_slice %75 {offsets = [0, 0], sizes = [8, 128], strides = [1, 1]} : vector<16x128xf32> to vector<8x128xf32>
    %77 = vector.extract_strided_slice %75 {offsets = [8, 0], sizes = [8, 128], strides = [1, 1]} : vector<16x128xf32> to vector<8x128xf32>
    %cst_29 = arith.constant dense<0.000000e+00> : vector<128xf32>
    %78 = vector.multi_reduction <add>, %76, %cst_29 [0] : vector<8x128xf32> to vector<128xf32>
    %79 = vector.shape_cast %78 : vector<128xf32> to vector<1x128xf32>
    %cst_30 = arith.constant 8.000000e+00 : f32
    %80 = vector.broadcast %cst_30 : f32 to vector<1x128xf32>
    %81 = arith.divf %79, %80 : vector<1x128xf32>
    %cst_31 = arith.constant dense<0.000000e+00> : vector<128xf32>
    %82 = vector.multi_reduction <add>, %77, %cst_31 [0] : vector<8x128xf32> to vector<128xf32>
    %83 = vector.shape_cast %82 : vector<128xf32> to vector<1x128xf32>
    %cst_32 = arith.constant 8.000000e+00 : f32
    %84 = vector.broadcast %cst_32 : f32 to vector<1x128xf32>
    %85 = arith.divf %83, %84 : vector<1x128xf32>
    %86 = vector.broadcast %81 : vector<1x128xf32> to vector<8x128xf32>
    %87 = arith.subf %76, %86 : vector<8x128xf32>
    %88 = arith.mulf %87, %87 : vector<8x128xf32>
    %cst_33 = arith.constant dense<0.000000e+00> : vector<128xf32>
    %89 = vector.multi_reduction <add>, %88, %cst_33 [0] : vector<8x128xf32> to vector<128xf32>
    %90 = vector.shape_cast %89 : vector<128xf32> to vector<1x128xf32>
    %cst_34 = arith.constant 8.000000e+00 : f32
    %91 = vector.broadcast %cst_34 : f32 to vector<1x128xf32>
    %92 = arith.divf %90, %91 : vector<1x128xf32>
    %93 = vector.broadcast %85 : vector<1x128xf32> to vector<8x128xf32>
    %94 = arith.subf %77, %93 : vector<8x128xf32>
    %95 = arith.mulf %94, %94 : vector<8x128xf32>
    %cst_35 = arith.constant dense<0.000000e+00> : vector<128xf32>
    %96 = vector.multi_reduction <add>, %95, %cst_35 [0] : vector<8x128xf32> to vector<128xf32>
    %97 = vector.shape_cast %96 : vector<128xf32> to vector<1x128xf32>
    %cst_36 = arith.constant 8.000000e+00 : f32
    %98 = vector.broadcast %cst_36 : f32 to vector<1x128xf32>
    %99 = arith.divf %97, %98 : vector<1x128xf32>
    %100 = tpu.iota {dimensions = array<i32: 0>} : vector<16x1xi32>
    %c8_i32_37 = arith.constant 8 : i32
    %101 = vector.broadcast %c8_i32_37 : i32 to vector<16x1xi32>
    %102 = arith.cmpi sge, %100, %101 : vector<16x1xi32>
    %103 = vector.shape_cast %102 : vector<16x1xi1> to vector<16x1xi1>
    %104 = vector.broadcast %103 : vector<16x1xi1> to vector<16x128xi1>
    %105 = vector.shape_cast %85 : vector<1x128xf32> to vector<1x128xf32>
    %106 = vector.broadcast %105 : vector<1x128xf32> to vector<16x128xf32>
    %107 = vector.shape_cast %81 : vector<1x128xf32> to vector<1x128xf32>
    %108 = vector.broadcast %107 : vector<1x128xf32> to vector<16x128xf32>
    %109 = arith.select %104, %106, %108 : vector<16x128xi1>, vector<16x128xf32>
    %cst_38 = arith.constant 9.99999974E-6 : f32
    %110 = vector.broadcast %cst_38 : f32 to vector<1x128xf32>
    %111 = arith.addf %99, %110 : vector<1x128xf32>
    %112 = math.rsqrt %111 : vector<1x128xf32>
    %cst_39 = arith.constant 9.99999974E-6 : f32
    %113 = vector.broadcast %cst_39 : f32 to vector<1x128xf32>
    %114 = arith.addf %92, %113 : vector<1x128xf32>
    %115 = math.rsqrt %114 : vector<1x128xf32>
    %116 = vector.shape_cast %102 : vector<16x1xi1> to vector<16x1xi1>
    %117 = vector.broadcast %116 : vector<16x1xi1> to vector<16x128xi1>
    %118 = vector.shape_cast %112 : vector<1x128xf32> to vector<1x128xf32>
    %119 = vector.broadcast %118 : vector<1x128xf32> to vector<16x128xf32>
    %120 = vector.shape_cast %115 : vector<1x128xf32> to vector<1x128xf32>
    %121 = vector.broadcast %120 : vector<1x128xf32> to vector<16x128xf32>
    %122 = arith.select %117, %119, %121 : vector<16x128xi1>, vector<16x128xf32>
    %123 = arith.subf %75, %109 : vector<16x128xf32>
    %124 = arith.mulf %123, %122 : vector<16x128xf32>
    %c0_40 = arith.constant 0 : index
    %c0_41 = arith.constant 0 : index
    %125 = vector.load %arg7[%c0_40, %c0_41] : memref<128x128xf32, #tpu.memory_space<vmem>>, vector<128x128xf32>
    %126 = arith.truncf %124 : vector<16x128xf32> to vector<16x128xbf16>
    %127 = arith.truncf %125 : vector<128x128xf32> to vector<128x128xbf16>
    %cst_42 = arith.constant dense<0.000000e+00> : vector<16x128xf32>
    %128 = tpu.matmul %126, %127, %cst_42 {dimension_numbers = #tpu.dot_dimension_numbers<[1], [0], [0], [1], [0, 0, 1, 1], [], []>} : vector<16x128xbf16>, vector<128x128xbf16>, vector<16x128xf32> -> vector<16x128xf32>
    %c0_43 = arith.constant 0 : index
    %c0_44 = arith.constant 0 : index
    %129 = vector.load %arg8[%c0_43, %c0_44] : memref<1x128xf32, #tpu.memory_space<vmem>>, vector<1x128xf32>
    %c0_45 = arith.constant 0 : index
    %c0_46 = arith.constant 0 : index
    %130 = vector.load %arg9[%c0_45, %c0_46] : memref<1x128xf32, #tpu.memory_space<vmem>>, vector<1x128xf32>
    %131 = vector.extract_strided_slice %128 {offsets = [0, 0], sizes = [8, 128], strides = [1, 1]} : vector<16x128xf32> to vector<8x128xf32>
    %132 = vector.extract_strided_slice %128 {offsets = [8, 0], sizes = [8, 128], strides = [1, 1]} : vector<16x128xf32> to vector<8x128xf32>
    %cst_47 = arith.constant dense<0.000000e+00> : vector<128xf32>
    %133 = vector.multi_reduction <add>, %131, %cst_47 [0] : vector<8x128xf32> to vector<128xf32>
    %134 = vector.shape_cast %133 : vector<128xf32> to vector<1x128xf32>
    %cst_48 = arith.constant 8.000000e+00 : f32
    %135 = vector.broadcast %cst_48 : f32 to vector<1x128xf32>
    %136 = arith.divf %134, %135 : vector<1x128xf32>
    %cst_49 = arith.constant dense<0.000000e+00> : vector<128xf32>
    %137 = vector.multi_reduction <add>, %132, %cst_49 [0] : vector<8x128xf32> to vector<128xf32>
    %138 = vector.shape_cast %137 : vector<128xf32> to vector<1x128xf32>
    %cst_50 = arith.constant 8.000000e+00 : f32
    %139 = vector.broadcast %cst_50 : f32 to vector<1x128xf32>
    %140 = arith.divf %138, %139 : vector<1x128xf32>
    %141 = vector.broadcast %136 : vector<1x128xf32> to vector<8x128xf32>
    %142 = arith.subf %131, %141 : vector<8x128xf32>
    %143 = arith.mulf %142, %142 : vector<8x128xf32>
    %cst_51 = arith.constant dense<0.000000e+00> : vector<128xf32>
    %144 = vector.multi_reduction <add>, %143, %cst_51 [0] : vector<8x128xf32> to vector<128xf32>
    %145 = vector.shape_cast %144 : vector<128xf32> to vector<1x128xf32>
    %cst_52 = arith.constant 8.000000e+00 : f32
    %146 = vector.broadcast %cst_52 : f32 to vector<1x128xf32>
    %147 = arith.divf %145, %146 : vector<1x128xf32>
    %148 = vector.broadcast %140 : vector<1x128xf32> to vector<8x128xf32>
    %149 = arith.subf %132, %148 : vector<8x128xf32>
    %150 = arith.mulf %149, %149 : vector<8x128xf32>
    %cst_53 = arith.constant dense<0.000000e+00> : vector<128xf32>
    %151 = vector.multi_reduction <add>, %150, %cst_53 [0] : vector<8x128xf32> to vector<128xf32>
    %152 = vector.shape_cast %151 : vector<128xf32> to vector<1x128xf32>
    %cst_54 = arith.constant 8.000000e+00 : f32
    %153 = vector.broadcast %cst_54 : f32 to vector<1x128xf32>
    %154 = arith.divf %152, %153 : vector<1x128xf32>
    %155 = tpu.iota {dimensions = array<i32: 0>} : vector<16x1xi32>
    %c8_i32_55 = arith.constant 8 : i32
    %156 = vector.broadcast %c8_i32_55 : i32 to vector<16x1xi32>
    %157 = arith.cmpi sge, %155, %156 : vector<16x1xi32>
    %158 = vector.shape_cast %157 : vector<16x1xi1> to vector<16x1xi1>
    %159 = vector.broadcast %158 : vector<16x1xi1> to vector<16x128xi1>
    %160 = vector.shape_cast %140 : vector<1x128xf32> to vector<1x128xf32>
    %161 = vector.broadcast %160 : vector<1x128xf32> to vector<16x128xf32>
    %162 = vector.shape_cast %136 : vector<1x128xf32> to vector<1x128xf32>
    %163 = vector.broadcast %162 : vector<1x128xf32> to vector<16x128xf32>
    %164 = arith.select %159, %161, %163 : vector<16x128xi1>, vector<16x128xf32>
    %cst_56 = arith.constant 9.99999974E-6 : f32
    %165 = vector.broadcast %cst_56 : f32 to vector<1x128xf32>
    %166 = arith.addf %154, %165 : vector<1x128xf32>
    %167 = math.rsqrt %166 : vector<1x128xf32>
    %cst_57 = arith.constant 9.99999974E-6 : f32
    %168 = vector.broadcast %cst_57 : f32 to vector<1x128xf32>
    %169 = arith.addf %147, %168 : vector<1x128xf32>
    %170 = math.rsqrt %169 : vector<1x128xf32>
    %171 = vector.shape_cast %157 : vector<16x1xi1> to vector<16x1xi1>
    %172 = vector.broadcast %171 : vector<16x1xi1> to vector<16x128xi1>
    %173 = vector.shape_cast %167 : vector<1x128xf32> to vector<1x128xf32>
    %174 = vector.broadcast %173 : vector<1x128xf32> to vector<16x128xf32>
    %175 = vector.shape_cast %170 : vector<1x128xf32> to vector<1x128xf32>
    %176 = vector.broadcast %175 : vector<1x128xf32> to vector<16x128xf32>
    %177 = arith.select %172, %174, %176 : vector<16x128xi1>, vector<16x128xf32>
    %178 = arith.subf %128, %164 : vector<16x128xf32>
    %179 = arith.mulf %178, %177 : vector<16x128xf32>
    %180 = vector.broadcast %129 : vector<1x128xf32> to vector<16x128xf32>
    %181 = arith.mulf %179, %180 : vector<16x128xf32>
    %182 = vector.broadcast %130 : vector<1x128xf32> to vector<16x128xf32>
    %183 = arith.addf %181, %182 : vector<16x128xf32>
    %cst_58 = arith.constant 0.000000e+00 : f32
    %184 = vector.broadcast %cst_58 : f32 to vector<16x128xf32>
    %185 = arith.maximumf %183, %184 : vector<16x128xf32>
    %c0_59 = arith.constant 0 : index
    %c0_60 = arith.constant 0 : index
    %186 = vector.load %arg10[%c0_59, %c0_60] : memref<128x128xf32, #tpu.memory_space<vmem>>, vector<128x128xf32>
    %187 = arith.truncf %185 : vector<16x128xf32> to vector<16x128xbf16>
    %188 = arith.truncf %186 : vector<128x128xf32> to vector<128x128xbf16>
    %cst_61 = arith.constant dense<0.000000e+00> : vector<16x128xf32>
    %189 = tpu.matmul %187, %188, %cst_61 {dimension_numbers = #tpu.dot_dimension_numbers<[1], [0], [0], [1], [0, 0, 1, 1], [], []>} : vector<16x128xbf16>, vector<128x128xbf16>, vector<16x128xf32> -> vector<16x128xf32>
    %c0_62 = arith.constant 0 : index
    %c0_63 = arith.constant 0 : index
    %190 = vector.load %arg11[%c0_62, %c0_63] : memref<16x128xf32, #tpu.memory_space<vmem>>, vector<16x128xf32>
    tpu.vector_store %arg11[%c0_62, %c0_63], %189 {strides = array<i32>} : memref<16x128xf32, #tpu.memory_space<vmem>>, vector<16x128xf32>,
    return
  }
}

</mosaic_0001>

<llo_original>
// kernel: tpu_custom_call.1
$region0: #{tpu_custom_call.1}
  #allocation0 [shape = 'u32[]', space=smem, size = 0x4, offset = 0x4, fixed_abs, tag = 'smem constant byte address 0x4 - core index']
  #allocation1 [shape = 'u32[144,128]{1,0:T(1,128)}', space=vmem, size = 0x12000, scoped, tag = 'internal scratch']
  %s0 = inlined_call_operand.hbm [shape: f32[16,4,768], index: 0, kind: input, shape index: {}]
  %s1 = inlined_call_operand.hbm [shape: f32[768,128], index: 1, kind: input, shape index: {}]
  %s2 = inlined_call_operand.vmem [shape: f32[1,128], index: 2, kind: input, shape index: {}]
  %s3 = inlined_call_operand.hbm [shape: f32[128,128], index: 3, kind: input, shape index: {}]
  %s4 = inlined_call_operand.vmem [shape: f32[1,128], index: 4, kind: input, shape index: {}]
  %s5 = inlined_call_operand.vmem [shape: f32[1,128], index: 5, kind: input, shape index: {}]
  %s6 = inlined_call_operand.hbm [shape: f32[128,128], index: 6, kind: input, shape index: {}]
  %s7 = inlined_call_operand.hbm [shape: f32[128,128], index: 7, kind: input, shape index: {}]
  %s8 = inlined_call_operand.vmem [shape: f32[1,128], index: 8, kind: input, shape index: {}]
  %s9 = inlined_call_operand.vmem [shape: f32[1,128], index: 9, kind: input, shape index: {}]
  %s10 = inlined_call_operand.hbm [shape: f32[128,128], index: 10, kind: input, shape index: {}]
  %s11 = inlined_call_operand.hbm [shape: f32[16,128], index: 11, kind: output, shape index: {}]
  %s12 = sld [smem:[#allocation0]]
  $region78: #{tpu_custom_call.1} parent=0
    _
  %s14 = ssub.s32 1, %s12
  %s15 = scalar_select 0, %s14, %s12
  $region1: #{tpu_custom_call.1} parent=0
    #allocation2 [shape = 'u8[196608]{0}', space=vmem, size = 0x30000, scoped, tag = 'input window, operand 0, single buffered']
    #allocation3 [shape = 's32[1]{0}', space=sflag, size = 0x4, scoped, tag = 'scoped memory for tpu_custom_call.1']
    #allocation4 [shape = 's32[1]{0}', space=sflag, size = 0x4, scoped, tag = 'scoped memory for tpu_custom_call.1']
    #allocation5 [shape = 'u8[393216]{0}', space=vmem, size = 0x60000, scoped, tag = 'input window, operand 1, single buffered']
    #allocation6 [shape = 's32[1]{0}', space=sflag, size = 0x4, scoped, tag = 'scoped memory for tpu_custom_call.1']
    #allocation7 [shape = 'u8[65536]{0}', space=vmem, size = 0x10000, scoped, tag = 'input window, operand 3, single buffered']
    #allocation8 [shape = 'u8[65536]{0}', space=vmem, size = 0x10000, scoped, tag = 'input window, operand 6, single buffered']
    #allocation9 [shape = 's32[1]{0}', space=sflag, size = 0x4, scoped, tag = 'scoped memory for tpu_custom_call.1']
    #allocation10 [shape = 'u8[65536]{0}', space=vmem, size = 0x10000, scoped, tag = 'input window, operand 7, single buffered']
    #allocation11 [shape = 'u8[65536]{0}', space=vmem, size = 0x10000, scoped, tag = 'input window, operand 10, single buffered']
    #allocation12 [shape = 's32[1]{0}', space=sflag, size = 0x4, scoped, tag = 'scoped memory for tpu_custom_call.1']
    #allocation13 [shape = 'u8[8192]{0}', space=vmem, size = 0x2000, scoped, tag = 'output window, operand 0, single buffered']
    %16 = vsyncpa [#allocation3], 0
    %17 = vsyncpa [#allocation6], 0
    %18 = vsyncpa [#allocation9], 0
    %19 = vsyncpa [#allocation12], 0
    %20 = vsyncpa [#allocation4], 0
    // Predicated region
    $region2: #{tpu_custom_call.1} parent=1 // pred_check
      _
    $region3: #{tpu_custom_call.1} parent=1 // pred_check_branch
      %22 = sbr.rel (0) target = $region5
    $region4: #{tpu_custom_call.1} parent=1 // pred_region
      %s24 = ssub.s32 6144, 6144
      %25 = vsyncadd [#allocation3], %s24
      %s26 = sshll.u32 [#allocation2], 4
      %s27 = int_to_ptr.vmem [resolvable:$true] %s26
      %32 = dma.hbm_to_vmem [thread:$0]  %s0, 6144, %s27, [#allocation3], 384, 384, 24
    $region5: #{tpu_custom_call.1} parent=1 // pred_fallthru
      _
    // Predicated region
    $region6: #{tpu_custom_call.1} parent=1 // pred_check
      _
    $region7: #{tpu_custom_call.1} parent=1 // pred_check_branch
      %34 = sbr.rel (0) target = $region9
    $region8: #{tpu_custom_call.1} parent=1 // pred_region
      %s36 = ssub.s32 12288, 12288
      %37 = vsyncadd [#allocation6], %s36
      %s38 = sshll.u32 [#allocation5], 4
      %s39 = int_to_ptr.vmem [resolvable:$true] %s38
      %44 = dma.hbm_to_vmem [thread:$0]  %s1, 12288, %s39, [#allocation6], 128, 128, 8
    $region9: #{tpu_custom_call.1} parent=1 // pred_fallthru
      _
    // Predicated region
    $region10: #{tpu_custom_call.1} parent=1 // pred_check
      _
    $region11: #{tpu_custom_call.1} parent=1 // pred_check_branch
      %46 = sbr.rel (0) target = $region13
    $region12: #{tpu_custom_call.1} parent=1 // pred_region
      _
    $region13: #{tpu_custom_call.1} parent=1 // pred_fallthru
      _
    // Predicated region
    $region14: #{tpu_custom_call.1} parent=1 // pred_check
      _
    $region15: #{tpu_custom_call.1} parent=1 // pred_check_branch
      %48 = sbr.rel (0) target = $region17
    $region16: #{tpu_custom_call.1} parent=1 // pred_region
      %s50 = ssub.s32 2048, 2048
      %51 = vsyncadd [#allocation6], %s50
      %s52 = sshll.u32 [#allocation7], 4
      %s53 = int_to_ptr.vmem [resolvable:$true] %s52
      %58 = dma.hbm_to_vmem [thread:$0]  %s3, 2048, %s53, [#allocation6], 128, 128, 8
    $region17: #{tpu_custom_call.1} parent=1 // pred_fallthru
      _
    // Predicated region
    $region18: #{tpu_custom_call.1} parent=1 // pred_check
      _
    $region19: #{tpu_custom_call.1} parent=1 // pred_check_branch
      %60 = sbr.rel (0) target = $region21
    $region20: #{tpu_custom_call.1} parent=1 // pred_region
      _
    $region21: #{tpu_custom_call.1} parent=1 // pred_fallthru
      _
    // Predicated region
    $region22: #{tpu_custom_call.1} parent=1 // pred_check
      _
    $region23: #{tpu_custom_call.1} parent=1 // pred_check_branch
      %62 = sbr.rel (0) target = $region25
    $region24: #{tpu_custom_call.1} parent=1 // pred_region
      _
    $region25: #{tpu_custom_call.1} parent=1 // pred_fallthru
      _
    // Predicated region
    $region26: #{tpu_custom_call.1} parent=1 // pred_check
      _
    $region27: #{tpu_custom_call.1} parent=1 // pred_check_branch
      %64 = sbr.rel (0) target = $region29
    $region28: #{tpu_custom_call.1} parent=1 // pred_region
      %s66 = ssub.s32 2048, 2048
      %67 = vsyncadd [#allocation9], %s66
      %s68 = sshll.u32 [#allocation8], 4
      %s69 = int_to_ptr.vmem [resolvable:$true] %s68
      %74 = dma.hbm_to_vmem [thread:$0]  %s6, 2048, %s69, [#allocation9], 128, 128, 8
    $region29: #{tpu_custom_call.1} parent=1 // pred_fallthru
      _
    // Predicated region
    $region30: #{tpu_custom_call.1} parent=1 // pred_check
      _
    $region31: #{tpu_custom_call.1} parent=1 // pred_check_branch
      %76 = sbr.rel (0) target = $region33
    $region32: #{tpu_custom_call.1} parent=1 // pred_region
      %s78 = ssub.s32 2048, 2048
      %79 = vsyncadd [#allocation9], %s78
      %s80 = sshll.u32 [#allocation10], 4
      %s81 = int_to_ptr.vmem [resolvable:$true] %s80
      %86 = dma.hbm_to_vmem [thread:$0]  %s7, 2048, %s81, [#allocation9], 128, 128, 8
    $region33: #{tpu_custom_call.1} parent=1 // pred_fallthru
      _
    // Predicated region
    $region34: #{tpu_custom_call.1} parent=1 // pred_check
      _
    $region35: #{tpu_custom_call.1} parent=1 // pred_check_branch
      %88 = sbr.rel (0) target = $region37
    $region36: #{tpu_custom_call.1} parent=1 // pred_region
      _
    $region37: #{tpu_custom_call.1} parent=1 // pred_fallthru
      _
    // Predicated region
    $region38: #{tpu_custom_call.1} parent=1 // pred_check
      _
    $region39: #{tpu_custom_call.1} parent=1 // pred_check_branch
      %90 = sbr.rel (0) target = $region41
    $region40: #{tpu_custom_call.1} parent=1 // pred_region
      _
    $region41: #{tpu_custom_call.1} parent=1 // pred_fallthru
      _
    // Predicated region
    $region42: #{tpu_custom_call.1} parent=1 // pred_check
      _
    $region43: #{tpu_custom_call.1} parent=1 // pred_check_branch
      %92 = sbr.rel (0) target = $region45
    $region44: #{tpu_custom_call.1} parent=1 // pred_region
      %s94 = ssub.s32 2048, 2048
      %95 = vsyncadd [#allocation12], %s94
      %s96 = sshll.u32 [#allocation11], 4
      %s97 = int_to_ptr.vmem [resolvable:$true] %s96
      %102 = dma.hbm_to_vmem [thread:$0]  %s10, 2048, %s97, [#allocation12], 128, 128, 8
    $region45: #{tpu_custom_call.1} parent=1 // pred_fallthru
      _
    // Predicated region
    $region46: #{tpu_custom_call.1} parent=1 // pred_check
      _
    $region47: #{tpu_custom_call.1} parent=1 // pred_check_branch
      %104 = sbr.rel (0) target = $region49
    $region48: #{tpu_custom_call.1} parent=1 // pred_region
      %105 = dma.done [#allocation3], 6144
    $region49: #{tpu_custom_call.1} parent=1 // pred_fallthru
      _
    // Predicated region
    $region50: #{tpu_custom_call.1} parent=1 // pred_check
      _
    $region51: #{tpu_custom_call.1} parent=1 // pred_check_branch
      %107 = sbr.rel (0) target = $region53
    $region52: #{tpu_custom_call.1} parent=1 // pred_region
      %108 = dma.done [#allocation6], 12288
    $region53: #{tpu_custom_call.1} parent=1 // pred_fallthru
      _
    // Predicated region
    $region54: #{tpu_custom_call.1} parent=1 // pred_check
      _
    $region55: #{tpu_custom_call.1} parent=1 // pred_check_branch
      %110 = sbr.rel (0) target = $region57
    $region56: #{tpu_custom_call.1} parent=1 // pred_region
      %111 = dma.done [#allocation6], 2048
    $region57: #{tpu_custom_call.1} parent=1 // pred_fallthru
      _
    // Predicated region
    $region58: #{tpu_custom_call.1} parent=1 // pred_check
      _
    $region59: #{tpu_custom_call.1} parent=1 // pred_check_branch
      %113 = sbr.rel (0) target = $region61
    $region60: #{tpu_custom_call.1} parent=1 // pred_region
      %114 = dma.done [#allocation9], 2048
    $region61: #{tpu_custom_call.1} parent=1 // pred_fallthru
      _
    // Predicated region
    $region62: #{tpu_custom_call.1} parent=1 // pred_check
      _
    $region63: #{tpu_custom_call.1} parent=1 // pred_check_branch
      %116 = sbr.rel (0) target = $region65
    $region64: #{tpu_custom_call.1} parent=1 // pred_region
      %117 = dma.done [#allocation9], 2048
    $region65: #{tpu_custom_call.1} parent=1 // pred_fallthru
      _
    // Predicated region
    $region66: #{tpu_custom_call.1} parent=1 // pred_check
      _
    $region67: #{tpu_custom_call.1} parent=1 // pred_check_branch
      %119 = sbr.rel (0) target = $region69
    $region68: #{tpu_custom_call.1} parent=1 // pred_region
      %120 = dma.done [#allocation12], 2048
    $region69: #{tpu_custom_call.1} parent=1 // pred_fallthru
      _
    %v122 = vld [vmem:[#allocation2] sm:$0xff]
    %v123 = vld [vmem:[#allocation2 + $0x8] sm:$0xff]
    %v124 = vld [vmem:[#allocation2 + $0x10] sm:$0xff]
    %v125 = vld [vmem:[#allocation2 + $0x18] sm:$0xff]
    %v126 = vld [vmem:[#allocation2 + $0x20] sm:$0xff]
    %v127 = vld [vmem:[#allocation2 + $0x28] sm:$0xff]
    %v128 = vld [vmem:[#allocation2 + $0x30] sm:$0xff]
    %v129 = vld [vmem:[#allocation2 + $0x38] sm:$0xff]
    %v130 = vld [vmem:[#allocation2 + $0x40] sm:$0xff]
    %v131 = vld [vmem:[#allocation2 + $0x48] sm:$0xff]
    %v132 = vld [vmem:[#allocation2 + $0x50] sm:$0xff]
    %v133 = vld [vmem:[#allocation2 + $0x58] sm:$0xff]
    %v134 = vld [vmem:[#allocation2 + $0x60] sm:$0xff]
    %v135 = vld [vmem:[#allocation2 + $0x68] sm:$0xff]
    %v136 = vld [vmem:[#allocation2 + $0x70] sm:$0xff]
    %v137 = vld [vmem:[#allocation2 + $0x78] sm:$0xff]
    %v138 = vld [vmem:[#allocation2 + $0x80] sm:$0xff]
    %v139 = vld [vmem:[#allocation2 + $0x88] sm:$0xff]
    %v140 = vld [vmem:[#allocation2 + $0x90] sm:$0xff]
    %v141 = vld [vmem:[#allocation2 + $0x98] sm:$0xff]
    %v142 = vld [vmem:[#allocation2 + $0xa0] sm:$0xff]
    %v143 = vld [vmem:[#allocation2 + $0xa8] sm:$0xff]
    %v144 = vld [vmem:[#allocation2 + $0xb0] sm:$0xff]
    %v145 = vld [vmem:[#allocation2 + $0xb8] sm:$0xff]
    %v146 = vld [vmem:[#allocation2 + $0xc0] sm:$0xff]
    %v147 = vld [vmem:[#allocation2 + $0xc8] sm:$0xff]
    %v148 = vld [vmem:[#allocation2 + $0xd0] sm:$0xff]
    %v149 = vld [vmem:[#allocation2 + $0xd8] sm:$0xff]
    %v150 = vld [vmem:[#allocation2 + $0xe0] sm:$0xff]
    %v151 = vld [vmem:[#allocation2 + $0xe8] sm:$0xff]
    %v152 = vld [vmem:[#allocation2 + $0xf0] sm:$0xff]
    %v153 = vld [vmem:[#allocation2 + $0xf8] sm:$0xff]
    %v154 = vld [vmem:[#allocation2 + $0x100] sm:$0xff]
    %v155 = vld [vmem:[#allocation2 + $0x108] sm:$0xff]
    %v156 = vld [vmem:[#allocation2 + $0x110] sm:$0xff]
    %v157 = vld [vmem:[#allocation2 + $0x118] sm:$0xff]
    %v158 = vld [vmem:[#allocation2 + $0x120] sm:$0xff]
    %v159 = vld [vmem:[#allocation2 + $0x128] sm:$0xff]
    %v160 = vld [vmem:[#allocation2 + $0x130] sm:$0xff]
    %v161 = vld [vmem:[#allocation2 + $0x138] sm:$0xff]
    %v162 = vld [vmem:[#allocation2 + $0x140] sm:$0xff]
    %v163 = vld [vmem:[#allocation2 + $0x148] sm:$0xff]
    %v164 = vld [vmem:[#allocation2 + $0x150] sm:$0xff]
    %v165 = vld [vmem:[#allocation2 + $0x158] sm:$0xff]
    %v166 = vld [vmem:[#allocation2 + $0x160] sm:$0xff]
    %v167 = vld [vmem:[#allocation2 + $0x168] sm:$0xff]
    %v168 = vld [vmem:[#allocation2 + $0x170] sm:$0xff]
    %v169 = vld [vmem:[#allocation2 + $0x178] sm:$0xff]
    %v218 = vcombine.high %v122, %v122
    %v219 = vcombine.high %v123, %v123
    %v220 = vcombine.high %v124, %v124
    %v221 = vcombine.high %v125, %v125
    %v222 = vcombine.high %v126, %v126
    %v223 = vcombine.high %v127, %v127
    %v224 = vcombine.high %v128, %v128
    %v225 = vcombine.high %v129, %v129
    %v226 = vcombine.high %v130, %v130
    %v227 = vcombine.high %v131, %v131
    %v228 = vcombine.high %v132, %v132
    %v229 = vcombine.high %v133, %v133
    %v230 = vcombine.high %v134, %v134
    %v231 = vcombine.high %v135, %v135
    %v232 = vcombine.high %v136, %v136
    %v233 = vcombine.high %v137, %v137
    %v234 = vcombine.high %v138, %v138
    %v235 = vcombine.high %v139, %v139
    %v236 = vcombine.high %v140, %v140
    %v237 = vcombine.high %v141, %v141
    %v238 = vcombine.high %v142, %v142
    %v239 = vcombine.high %v143, %v143
    %v240 = vcombine.high %v144, %v144
    %v241 = vcombine.high %v145, %v145
    %v242 = vcombine.high %v146, %v146
    %v243 = vcombine.high %v147, %v147
    %v244 = vcombine.high %v148, %v148
    %v245 = vcombine.high %v149, %v149
    %v246 = vcombine.high %v150, %v150
    %v247 = vcombine.high %v151, %v151
    %v248 = vcombine.high %v152, %v152
    %v249 = vcombine.high %v153, %v153
    %v250 = vcombine.high %v154, %v154
    %v251 = vcombine.high %v155, %v155
    %v252 = vcombine.high %v156, %v156
    %v253 = vcombine.high %v157, %v157
    %v254 = vcombine.high %v158, %v158
    %v255 = vcombine.high %v159, %v159
    %v256 = vcombine.high %v160, %v160
    %v257 = vcombine.high %v161, %v161
    %v258 = vcombine.high %v162, %v162
    %v259 = vcombine.high %v163, %v163
    %v260 = vcombine.high %v164, %v164
    %v261 = vcombine.high %v165, %v165
    %v262 = vcombine.high %v166, %v166
    %v263 = vcombine.high %v167, %v167
    %v264 = vcombine.high %v168, %v168
    %v265 = vcombine.high %v169, %v169
    %vm314 = vcmask 1043456
    %v315 = vsel %vm314, %v122, 0.0
    %v316 = vrot.slane %v315, 4
    %v317 = vadd.f32 %v315, %v316
    %v318 = vrot.slane %v317, 2
    %v319 = vadd.f32 %v317, %v318
    %v320 = vrot.slane %v319, 1
    %v321 = vadd.f32 %v319, %v320
    %v322 = vsel %vm314, %v218, 0.0
    %v323 = vrot.slane %v322, 4
    %v324 = vadd.f32 %v322, %v323
    %v325 = vrot.slane %v324, 2
    %v326 = vadd.f32 %v324, %v325
    %v327 = vrot.slane %v326, 1
    %v328 = vadd.f32 %v326, %v327
    %v329 = vsel %vm314, %v123, 0.0
    %v330 = vrot.slane %v329, 4
    %v331 = vadd.f32 %v329, %v330
    %v332 = vrot.slane %v331, 2
    %v333 = vadd.f32 %v331, %v332
    %v334 = vrot.slane %v333, 1
    %v335 = vadd.f32 %v333, %v334
    %v336 = vsel %vm314, %v219, 0.0
    %v337 = vrot.slane %v336, 4
    %v338 = vadd.f32 %v336, %v337
    %v339 = vrot.slane %v338, 2
    %v340 = vadd.f32 %v338, %v339
    %v341 = vrot.slane %v340, 1
    %v342 = vadd.f32 %v340, %v341
    %v343 = vsel %vm314, %v124, 0.0
    %v344 = vrot.slane %v343, 4
    %v345 = vadd.f32 %v343, %v344
    %v346 = vrot.slane %v345, 2
    %v347 = vadd.f32 %v345, %v346
    %v348 = vrot.slane %v347, 1
    %v349 = vadd.f32 %v347, %v348
    %v350 = vsel %vm314, %v220, 0.0
    %v351 = vrot.slane %v350, 4
    %v352 = vadd.f32 %v350, %v351
    %v353 = vrot.slane %v352, 2
    %v354 = vadd.f32 %v352, %v353
    %v355 = vrot.slane %v354, 1
    %v356 = vadd.f32 %v354, %v355
    %v357 = vsel %vm314, %v125, 0.0
    %v358 = vrot.slane %v357, 4
    %v359 = vadd.f32 %v357, %v358
    %v360 = vrot.slane %v359, 2
    %v361 = vadd.f32 %v359, %v360
    %v362 = vrot.slane %v361, 1
    %v363 = vadd.f32 %v361, %v362
    %v364 = vsel %vm314, %v221, 0.0
    %v365 = vrot.slane %v364, 4
    %v366 = vadd.f32 %v364, %v365
    %v367 = vrot.slane %v366, 2
    %v368 = vadd.f32 %v366, %v367
    %v369 = vrot.slane %v368, 1
    %v370 = vadd.f32 %v368, %v369
    %v371 = vsel %vm314, %v126, 0.0
    %v372 = vrot.slane %v371, 4
    %v373 = vadd.f32 %v371, %v372
    %v374 = vrot.slane %v373, 2
    %v375 = vadd.f32 %v373, %v374
    %v376 = vrot.slane %v375, 1
    %v377 = vadd.f32 %v375, %v376
    %v378 = vsel %vm314, %v222, 0.0
    %v379 = vrot.slane %v378, 4
    %v380 = vadd.f32 %v378, %v379
    %v381 = vrot.slane %v380, 2
    %v382 = vadd.f32 %v380, %v381
    %v383 = vrot.slane %v382, 1
    %v384 = vadd.f32 %v382, %v383
    %v385 = vsel %vm314, %v127, 0.0
    %v386 = vrot.slane %v385, 4
    %v387 = vadd.f32 %v385, %v386
    %v388 = vrot.slane %v387, 2
    %v389 = vadd.f32 %v387, %v388
    %v390 = vrot.slane %v389, 1
    %v391 = vadd.f32 %v389, %v390
    %v392 = vsel %vm314, %v223, 0.0
    %v393 = vrot.slane %v392, 4
    %v394 = vadd.f32 %v392, %v393
    %v395 = vrot.slane %v394, 2
    %v396 = vadd.f32 %v394, %v395
    %v397 = vrot.slane %v396, 1
    %v398 = vadd.f32 %v396, %v397
    %v399 = vsel %vm314, %v128, 0.0
    %v400 = vrot.slane %v399, 4
    %v401 = vadd.f32 %v399, %v400
    %v402 = vrot.slane %v401, 2
    %v403 = vadd.f32 %v401, %v402
    %v404 = vrot.slane %v403, 1
    %v405 = vadd.f32 %v403, %v404
    %v406 = vsel %vm314, %v224, 0.0
    %v407 = vrot.slane %v406, 4
    %v408 = vadd.f32 %v406, %v407
    %v409 = vrot.slane %v408, 2
    %v410 = vadd.f32 %v408, %v409
    %v411 = vrot.slane %v410, 1
    %v412 = vadd.f32 %v410, %v411
    %v413 = vsel %vm314, %v129, 0.0
    %v414 = vrot.slane %v413, 4
    %v415 = vadd.f32 %v413, %v414
    %v416 = vrot.slane %v415, 2
    %v417 = vadd.f32 %v415, %v416
    %v418 = vrot.slane %v417, 1
    %v419 = vadd.f32 %v417, %v418
    %v420 = vsel %vm314, %v225, 0.0
    %v421 = vrot.slane %v420, 4
    %v422 = vadd.f32 %v420, %v421
    %v423 = vrot.slane %v422, 2
    %v424 = vadd.f32 %v422, %v423
    %v425 = vrot.slane %v424, 1
    %v426 = vadd.f32 %v424, %v425
    %v427 = vsel %vm314, %v130, 0.0
    %v428 = vrot.slane %v427, 4
    %v429 = vadd.f32 %v427, %v428
    %v430 = vrot.slane %v429, 2
    %v431 = vadd.f32 %v429, %v430
    %v432 = vrot.slane %v431, 1
    %v433 = vadd.f32 %v431, %v432
    %v434 = vsel %vm314, %v226, 0.0
    %v435 = vrot.slane %v434, 4
    %v436 = vadd.f32 %v434, %v435
    %v437 = vrot.slane %v436, 2
    %v438 = vadd.f32 %v436, %v437
    %v439 = vrot.slane %v438, 1
    %v440 = vadd.f32 %v438, %v439
    %v441 = vsel %vm314, %v131, 0.0
    %v442 = vrot.slane %v441, 4
    %v443 = vadd.f32 %v441, %v442
    %v444 = vrot.slane %v443, 2
    %v445 = vadd.f32 %v443, %v444
    %v446 = vrot.slane %v445, 1
    %v447 = vadd.f32 %v445, %v446
    %v448 = vsel %vm314, %v227, 0.0
    %v449 = vrot.slane %v448, 4
    %v450 = vadd.f32 %v448, %v449
    %v451 = vrot.slane %v450, 2
    %v452 = vadd.f32 %v450, %v451
    %v453 = vrot.slane %v452, 1
    %v454 = vadd.f32 %v452, %v453
    %v455 = vsel %vm314, %v132, 0.0
    %v456 = vrot.slane %v455, 4
    %v457 = vadd.f32 %v455, %v456
    %v458 = vrot.slane %v457, 2
    %v459 = vadd.f32 %v457, %v458
    %v460 = vrot.slane %v459, 1
    %v461 = vadd.f32 %v459, %v460
    %v462 = vsel %vm314, %v228, 0.0
    %v463 = vrot.slane %v462, 4
    %v464 = vadd.f32 %v462, %v463
    %v465 = vrot.slane %v464, 2
    %v466 = vadd.f32 %v464, %v465
    %v467 = vrot.slane %v466, 1
    %v468 = vadd.f32 %v466, %v467
    %v469 = vsel %vm314, %v133, 0.0
    %v470 = vrot.slane %v469, 4
    %v471 = vadd.f32 %v469, %v470
    %v472 = vrot.slane %v471, 2
    %v473 = vadd.f32 %v471, %v472
    %v474 = vrot.slane %v473, 1
    %v475 = vadd.f32 %v473, %v474
    %v476 = vsel %vm314, %v229, 0.0
    %v477 = vrot.slane %v476, 4
    %v478 = vadd.f32 %v476, %v477
    %v479 = vrot.slane %v478, 2
    %v480 = vadd.f32 %v478, %v479
    %v481 = vrot.slane %v480, 1
    %v482 = vadd.f32 %v480, %v481
    %v483 = vsel %vm314, %v134, 0.0
    %v484 = vrot.slane %v483, 4
    %v485 = vadd.f32 %v483, %v484
    %v486 = vrot.slane %v485, 2
    %v487 = vadd.f32 %v485, %v486
    %v488 = vrot.slane %v487, 1
    %v489 = vadd.f32 %v487, %v488
    %v490 = vsel %vm314, %v230, 0.0
    %v491 = vrot.slane %v490, 4
    %v492 = vadd.f32 %v490, %v491
    %v493 = vrot.slane %v492, 2
    %v494 = vadd.f32 %v492, %v493
    %v495 = vrot.slane %v494, 1
    %v496 = vadd.f32 %v494, %v495
    %v497 = vsel %vm314, %v135, 0.0
    %v498 = vrot.slane %v497, 4
    %v499 = vadd.f32 %v497, %v498
    %v500 = vrot.slane %v499, 2
    %v501 = vadd.f32 %v499, %v500
    %v502 = vrot.slane %v501, 1
    %v503 = vadd.f32 %v501, %v502
    %v504 = vsel %vm314, %v231, 0.0
    %v505 = vrot.slane %v504, 4
    %v506 = vadd.f32 %v504, %v505
    %v507 = vrot.slane %v506, 2
    %v508 = vadd.f32 %v506, %v507
    %v509 = vrot.slane %v508, 1
    %v510 = vadd.f32 %v508, %v509
    %v511 = vsel %vm314, %v136, 0.0
    %v512 = vrot.slane %v511, 4
    %v513 = vadd.f32 %v511, %v512
    %v514 = vrot.slane %v513, 2
    %v515 = vadd.f32 %v513, %v514
    %v516 = vrot.slane %v515, 1
    %v517 = vadd.f32 %v515, %v516
    %v518 = vsel %vm314, %v232, 0.0
    %v519 = vrot.slane %v518, 4
    %v520 = vadd.f32 %v518, %v519
    %v521 = vrot.slane %v520, 2
    %v522 = vadd.f32 %v520, %v521
    %v523 = vrot.slane %v522, 1
    %v524 = vadd.f32 %v522, %v523
    %v525 = vsel %vm314, %v137, 0.0
    %v526 = vrot.slane %v525, 4
    %v527 = vadd.f32 %v525, %v526
    %v528 = vrot.slane %v527, 2
    %v529 = vadd.f32 %v527, %v528
    %v530 = vrot.slane %v529, 1
    %v531 = vadd.f32 %v529, %v530
    %v532 = vsel %vm314, %v233, 0.0
    %v533 = vrot.slane %v532, 4
    %v534 = vadd.f32 %v532, %v533
    %v535 = vrot.slane %v534, 2
    %v536 = vadd.f32 %v534, %v535
    %v537 = vrot.slane %v536, 1
    %v538 = vadd.f32 %v536, %v537
    %v539 = vsel %vm314, %v138, 0.0
    %v540 = vrot.slane %v539, 4
    %v541 = vadd.f32 %v539, %v540
    %v542 = vrot.slane %v541, 2
    %v543 = vadd.f32 %v541, %v542
    %v544 = vrot.slane %v543, 1
    %v545 = vadd.f32 %v543, %v544
    %v546 = vsel %vm314, %v234, 0.0
    %v547 = vrot.slane %v546, 4
    %v548 = vadd.f32 %v546, %v547
    %v549 = vrot.slane %v548, 2
    %v550 = vadd.f32 %v548, %v549
    %v551 = vrot.slane %v550, 1
    %v552 = vadd.f32 %v550, %v551
    %v553 = vsel %vm314, %v139, 0.0
    %v554 = vrot.slane %v553, 4
    %v555 = vadd.f32 %v553, %v554
    %v556 = vrot.slane %v555, 2
    %v557 = vadd.f32 %v555, %v556
    %v558 = vrot.slane %v557, 1
    %v559 = vadd.f32 %v557, %v558
    %v560 = vsel %vm314, %v235, 0.0
    %v561 = vrot.slane %v560, 4
    %v562 = vadd.f32 %v560, %v561
    %v563 = vrot.slane %v562, 2
    %v564 = vadd.f32 %v562, %v563
    %v565 = vrot.slane %v564, 1
    %v566 = vadd.f32 %v564, %v565
    %v567 = vsel %vm314, %v140, 0.0
    %v568 = vrot.slane %v567, 4
    %v569 = vadd.f32 %v567, %v568
    %v570 = vrot.slane %v569, 2
    %v571 = vadd.f32 %v569, %v570
    %v572 = vrot.slane %v571, 1
    %v573 = vadd.f32 %v571, %v572
    %v574 = vsel %vm314, %v236, 0.0
    %v575 = vrot.slane %v574, 4
    %v576 = vadd.f32 %v574, %v575
    %v577 = vrot.slane %v576, 2
    %v578 = vadd.f32 %v576, %v577
    %v579 = vrot.slane %v578, 1
    %v580 = vadd.f32 %v578, %v579
    %v581 = vsel %vm314, %v141, 0.0
    %v582 = vrot.slane %v581, 4
    %v583 = vadd.f32 %v581, %v582
    %v584 = vrot.slane %v583, 2
    %v585 = vadd.f32 %v583, %v584
    %v586 = vrot.slane %v585, 1
    %v587 = vadd.f32 %v585, %v586
    %v588 = vsel %vm314, %v237, 0.0
    %v589 = vrot.slane %v588, 4
    %v590 = vadd.f32 %v588, %v589
    %v591 = vrot.slane %v590, 2
    %v592 = vadd.f32 %v590, %v591
    %v593 = vrot.slane %v592, 1
    %v594 = vadd.f32 %v592, %v593
    %v595 = vsel %vm314, %v142, 0.0
    %v596 = vrot.slane %v595, 4
    %v597 = vadd.f32 %v595, %v596
    %v598 = vrot.slane %v597, 2
    %v599 = vadd.f32 %v597, %v598
    %v600 = vrot.slane %v599, 1
    %v601 = vadd.f32 %v599, %v600
    %v602 = vsel %vm314, %v238, 0.0
    %v603 = vrot.slane %v602, 4
    %v604 = vadd.f32 %v602, %v603
    %v605 = vrot.slane %v604, 2
    %v606 = vadd.f32 %v604, %v605
    %v607 = vrot.slane %v606, 1
    %v608 = vadd.f32 %v606, %v607
    %v609 = vsel %vm314, %v143, 0.0
    %v610 = vrot.slane %v609, 4
    %v611 = vadd.f32 %v609, %v610
    %v612 = vrot.slane %v611, 2
    %v613 = vadd.f32 %v611, %v612
    %v614 = vrot.slane %v613, 1
    %v615 = vadd.f32 %v613, %v614
    %v616 = vsel %vm314, %v239, 0.0
    %v617 = vrot.slane %v616, 4
    %v618 = vadd.f32 %v616, %v617
    %v619 = vrot.slane %v618, 2
    %v620 = vadd.f32 %v618, %v619
    %v621 = vrot.slane %v620, 1
    %v622 = vadd.f32 %v620, %v621
    %v623 = vsel %vm314, %v144, 0.0
    %v624 = vrot.slane %v623, 4
    %v625 = vadd.f32 %v623, %v624
    %v626 = vrot.slane %v625, 2
    %v627 = vadd.f32 %v625, %v626
    %v628 = vrot.slane %v627, 1
    %v629 = vadd.f32 %v627, %v628
    %v630 = vsel %vm314, %v240, 0.0
    %v631 = vrot.slane %v630, 4
    %v632 = vadd.f32 %v630, %v631
    %v633 = vrot.slane %v632, 2
    %v634 = vadd.f32 %v632, %v633
    %v635 = vrot.slane %v634, 1
    %v636 = vadd.f32 %v634, %v635
    %v637 = vsel %vm314, %v145, 0.0
    %v638 = vrot.slane %v637, 4
    %v639 = vadd.f32 %v637, %v638
    %v640 = vrot.slane %v639, 2
    %v641 = vadd.f32 %v639, %v640
    %v642 = vrot.slane %v641, 1
    %v643 = vadd.f32 %v641, %v642
    %v644 = vsel %vm314, %v241, 0.0
    %v645 = vrot.slane %v644, 4
    %v646 = vadd.f32 %v644, %v645
    %v647 = vrot.slane %v646, 2
    %v648 = vadd.f32 %v646, %v647
    %v649 = vrot.slane %v648, 1
    %v650 = vadd.f32 %v648, %v649
    %v651 = vsel %vm314, %v146, 0.0
    %v652 = vrot.slane %v651, 4
    %v653 = vadd.f32 %v651, %v652
    %v654 = vrot.slane %v653, 2
    %v655 = vadd.f32 %v653, %v654
    %v656 = vrot.slane %v655, 1
    %v657 = vadd.f32 %v655, %v656
    %v658 = vsel %vm314, %v242, 0.0
    %v659 = vrot.slane %v658, 4
    %v660 = vadd.f32 %v658, %v659
    %v661 = vrot.slane %v660, 2
    %v662 = vadd.f32 %v660, %v661
    %v663 = vrot.slane %v662, 1
    %v664 = vadd.f32 %v662, %v663
    %v665 = vsel %vm314, %v147, 0.0
    %v666 = vrot.slane %v665, 4
    %v667 = vadd.f32 %v665, %v666
    %v668 = vrot.slane %v667, 2
    %v669 = vadd.f32 %v667, %v668
    %v670 = vrot.slane %v669, 1
    %v671 = vadd.f32 %v669, %v670
    %v672 = vsel %vm314, %v243, 0.0
    %v673 = vrot.slane %v672, 4
    %v674 = vadd.f32 %v672, %v673
    %v675 = vrot.slane %v674, 2
    %v676 = vadd.f32 %v674, %v675
    %v677 = vrot.slane %v676, 1
    %v678 = vadd.f32 %v676, %v677
    %v679 = vsel %vm314, %v148, 0.0
    %v680 = vrot.slane %v679, 4
    %v681 = vadd.f32 %v679, %v680
    %v682 = vrot.slane %v681, 2
    %v683 = vadd.f32 %v681, %v682
    %v684 = vrot.slane %v683, 1
    %v685 = vadd.f32 %v683, %v684
    %v686 = vsel %vm314, %v244, 0.0
    %v687 = vrot.slane %v686, 4
    %v688 = vadd.f32 %v686, %v687
    %v689 = vrot.slane %v688, 2
    %v690 = vadd.f32 %v688, %v689
    %v691 = vrot.slane %v690, 1
    %v692 = vadd.f32 %v690, %v691
    %v693 = vsel %vm314, %v149, 0.0
    %v694 = vrot.slane %v693, 4
    %v695 = vadd.f32 %v693, %v694
    %v696 = vrot.slane %v695, 2
    %v697 = vadd.f32 %v695, %v696
    %v698 = vrot.slane %v697, 1
    %v699 = vadd.f32 %v697, %v698
    %v700 = vsel %vm314, %v245, 0.0
    %v701 = vrot.slane %v700, 4
    %v702 = vadd.f32 %v700, %v701
    %v703 = vrot.slane %v702, 2
    %v704 = vadd.f32 %v702, %v703
    %v705 = vrot.slane %v704, 1
    %v706 = vadd.f32 %v704, %v705
    %v707 = vsel %vm314, %v150, 0.0
    %v708 = vrot.slane %v707, 4
    %v709 = vadd.f32 %v707, %v708
    %v710 = vrot.slane %v709, 2
    %v711 = vadd.f32 %v709, %v710
    %v712 = vrot.slane %v711, 1
    %v713 = vadd.f32 %v711, %v712
    %v714 = vsel %vm314, %v246, 0.0
    %v715 = vrot.slane %v714, 4
    %v716 = vadd.f32 %v714, %v715
    %v717 = vrot.slane %v716, 2
    %v718 = vadd.f32 %v716, %v717
    %v719 = vrot.slane %v718, 1
    %v720 = vadd.f32 %v718, %v719
    %v721 = vsel %vm314, %v151, 0.0
    %v722 = vrot.slane %v721, 4
    %v723 = vadd.f32 %v721, %v722
    %v724 = vrot.slane %v723, 2
    %v725 = vadd.f32 %v723, %v724
    %v726 = vrot.slane %v725, 1
    %v727 = vadd.f32 %v725, %v726
    %v728 = vsel %vm314, %v247, 0.0
    %v729 = vrot.slane %v728, 4
    %v730 = vadd.f32 %v728, %v729
    %v731 = vrot.slane %v730, 2
    %v732 = vadd.f32 %v730, %v731
    %v733 = vrot.slane %v732, 1
    %v734 = vadd.f32 %v732, %v733
    %v735 = vsel %vm314, %v152, 0.0
    %v736 = vrot.slane %v735, 4
    %v737 = vadd.f32 %v735, %v736
    %v738 = vrot.slane %v737, 2
    %v739 = vadd.f32 %v737, %v738
    %v740 = vrot.slane %v739, 1
    %v741 = vadd.f32 %v739, %v740
    %v742 = vsel %vm314, %v248, 0.0
    %v743 = vrot.slane %v742, 4
    %v744 = vadd.f32 %v742, %v743
    %v745 = vrot.slane %v744, 2
    %v746 = vadd.f32 %v744, %v745
    %v747 = vrot.slane %v746, 1
    %v748 = vadd.f32 %v746, %v747
    %v749 = vsel %vm314, %v153, 0.0
    %v750 = vrot.slane %v749, 4
    %v751 = vadd.f32 %v749, %v750
    %v752 = vrot.slane %v751, 2
    %v753 = vadd.f32 %v751, %v752
    %v754 = vrot.slane %v753, 1
    %v755 = vadd.f32 %v753, %v754
    %v756 = vsel %vm314, %v249, 0.0
    %v757 = vrot.slane %v756, 4
    %v758 = vadd.f32 %v756, %v757
    %v759 = vrot.slane %v758, 2
    %v760 = vadd.f32 %v758, %v759
    %v761 = vrot.slane %v760, 1
    %v762 = vadd.f32 %v760, %v761
    %v763 = vsel %vm314, %v154, 0.0
    %v764 = vrot.slane %v763, 4
    %v765 = vadd.f32 %v763, %v764
    %v766 = vrot.slane %v765, 2
    %v767 = vadd.f32 %v765, %v766
    %v768 = vrot.slane %v767, 1
    %v769 = vadd.f32 %v767, %v768
    %v770 = vsel %vm314, %v250, 0.0
    %v771 = vrot.slane %v770, 4
    %v772 = vadd.f32 %v770, %v771
    %v773 = vrot.slane %v772, 2
    %v774 = vadd.f32 %v772, %v773
    %v775 = vrot.slane %v774, 1
    %v776 = vadd.f32 %v774, %v775
    %v777 = vsel %vm314, %v155, 0.0
    %v778 = vrot.slane %v777, 4
    %v779 = vadd.f32 %v777, %v778
    %v780 = vrot.slane %v779, 2
    %v781 = vadd.f32 %v779, %v780
    %v782 = vrot.slane %v781, 1
    %v783 = vadd.f32 %v781, %v782
    %v784 = vsel %vm314, %v251, 0.0
    %v785 = vrot.slane %v784, 4
    %v786 = vadd.f32 %v784, %v785
    %v787 = vrot.slane %v786, 2
    %v788 = vadd.f32 %v786, %v787
    %v789 = vrot.slane %v788, 1
    %v790 = vadd.f32 %v788, %v789
    %v791 = vsel %vm314, %v156, 0.0
    %v792 = vrot.slane %v791, 4
    %v793 = vadd.f32 %v791, %v792
    %v794 = vrot.slane %v793, 2
    %v795 = vadd.f32 %v793, %v794
    %v796 = vrot.slane %v795, 1
    %v797 = vadd.f32 %v795, %v796
    %v798 = vsel %vm314, %v252, 0.0
    %v799 = vrot.slane %v798, 4
    %v800 = vadd.f32 %v798, %v799
    %v801 = vrot.slane %v800, 2
    %v802 = vadd.f32 %v800, %v801
    %v803 = vrot.slane %v802, 1
    %v804 = vadd.f32 %v802, %v803
    %v805 = vsel %vm314, %v157, 0.0
    %v806 = vrot.slane %v805, 4
    %v807 = vadd.f32 %v805, %v806
    %v808 = vrot.slane %v807, 2
    %v809 = vadd.f32 %v807, %v808
    %v810 = vrot.slane %v809, 1
    %v811 = vadd.f32 %v809, %v810
    %v812 = vsel %vm314, %v253, 0.0
    %v813 = vrot.slane %v812, 4
    %v814 = vadd.f32 %v812, %v813
    %v815 = vrot.slane %v814, 2
    %v816 = vadd.f32 %v814, %v815
    %v817 = vrot.slane %v816, 1
    %v818 = vadd.f32 %v816, %v817
    %v819 = vsel %vm314, %v158, 0.0
    %v820 = vrot.slane %v819, 4
    %v821 = vadd.f32 %v819, %v820
    %v822 = vrot.slane %v821, 2
    %v823 = vadd.f32 %v821, %v822
    %v824 = vrot.slane %v823, 1
    %v825 = vadd.f32 %v823, %v824
    %v826 = vsel %vm314, %v254, 0.0
    %v827 = vrot.slane %v826, 4
    %v828 = vadd.f32 %v826, %v827
    %v829 = vrot.slane %v828, 2
    %v830 = vadd.f32 %v828, %v829
    %v831 = vrot.slane %v830, 1
    %v832 = vadd.f32 %v830, %v831
    %v833 = vsel %vm314, %v159, 0.0
    %v834 = vrot.slane %v833, 4
    %v835 = vadd.f32 %v833, %v834
    %v836 = vrot.slane %v835, 2
    %v837 = vadd.f32 %v835, %v836
    %v838 = vrot.slane %v837, 1
    %v839 = vadd.f32 %v837, %v838
    %v840 = vsel %vm314, %v255, 0.0
    %v841 = vrot.slane %v840, 4
    %v842 = vadd.f32 %v840, %v841
    %v843 = vrot.slane %v842, 2
    %v844 = vadd.f32 %v842, %v843
    %v845 = vrot.slane %v844, 1
    %v846 = vadd.f32 %v844, %v845
    %v847 = vsel %vm314, %v160, 0.0
    %v848 = vrot.slane %v847, 4
    %v849 = vadd.f32 %v847, %v848
    %v850 = vrot.slane %v849, 2
    %v851 = vadd.f32 %v849, %v850
    %v852 = vrot.slane %v851, 1
    %v853 = vadd.f32 %v851, %v852
    %v854 = vsel %vm314, %v256, 0.0
    %v855 = vrot.slane %v854, 4
    %v856 = vadd.f32 %v854, %v855
    %v857 = vrot.slane %v856, 2
    %v858 = vadd.f32 %v856, %v857
    %v859 = vrot.slane %v858, 1
    %v860 = vadd.f32 %v858, %v859
    %v861 = vsel %vm314, %v161, 0.0
    %v862 = vrot.slane %v861, 4
    %v863 = vadd.f32 %v861, %v862
    %v864 = vrot.slane %v863, 2
    %v865 = vadd.f32 %v863, %v864
    %v866 = vrot.slane %v865, 1
    %v867 = vadd.f32 %v865, %v866
    %v868 = vsel %vm314, %v257, 0.0
    %v869 = vrot.slane %v868, 4
    %v870 = vadd.f32 %v868, %v869
    %v871 = vrot.slane %v870, 2
    %v872 = vadd.f32 %v870, %v871
    %v873 = vrot.slane %v872, 1
    %v874 = vadd.f32 %v872, %v873
    %v875 = vsel %vm314, %v162, 0.0
    %v876 = vrot.slane %v875, 4
    %v877 = vadd.f32 %v875, %v876
    %v878 = vrot.slane %v877, 2
    %v879 = vadd.f32 %v877, %v878
    %v880 = vrot.slane %v879, 1
    %v881 = vadd.f32 %v879, %v880
    %v882 = vsel %vm314, %v258, 0.0
    %v883 = vrot.slane %v882, 4
    %v884 = vadd.f32 %v882, %v883
    %v885 = vrot.slane %v884, 2
    %v886 = vadd.f32 %v884, %v885
    %v887 = vrot.slane %v886, 1
    %v888 = vadd.f32 %v886, %v887
    %v889 = vsel %vm314, %v163, 0.0
    %v890 = vrot.slane %v889, 4
    %v891 = vadd.f32 %v889, %v890
    %v892 = vrot.slane %v891, 2
    %v893 = vadd.f32 %v891, %v892
    %v894 = vrot.slane %v893, 1
    %v895 = vadd.f32 %v893, %v894
    %v896 = vsel %vm314, %v259, 0.0
    %v897 = vrot.slane %v896, 4
    %v898 = vadd.f32 %v896, %v897
    %v899 = vrot.slane %v898, 2
    %v900 = vadd.f32 %v898, %v899
    %v901 = vrot.slane %v900, 1
    %v902 = vadd.f32 %v900, %v901
    %v903 = vsel %vm314, %v164, 0.0
    %v904 = vrot.slane %v903, 4
    %v905 = vadd.f32 %v903, %v904
    %v906 = vrot.slane %v905, 2
    %v907 = vadd.f32 %v905, %v906
    %v908 = vrot.slane %v907, 1
    %v909 = vadd.f32 %v907, %v908
    %v910 = vsel %vm314, %v260, 0.0
    %v911 = vrot.slane %v910, 4
    %v912 = vadd.f32 %v910, %v911
    %v913 = vrot.slane %v912, 2
    %v914 = vadd.f32 %v912, %v913
    %v915 = vrot.slane %v914, 1
    %v916 = vadd.f32 %v914, %v915
    %v917 = vsel %vm314, %v165, 0.0
    %v918 = vrot.slane %v917, 4
    %v919 = vadd.f32 %v917, %v918
    %v920 = vrot.slane %v919, 2
    %v921 = vadd.f32 %v919, %v920
    %v922 = vrot.slane %v921, 1
    %v923 = vadd.f32 %v921, %v922
    %v924 = vsel %vm314, %v261, 0.0
    %v925 = vrot.slane %v924, 4
    %v926 = vadd.f32 %v924, %v925
    %v927 = vrot.slane %v926, 2
    %v928 = vadd.f32 %v926, %v927
    %v929 = vrot.slane %v928, 1
    %v930 = vadd.f32 %v928, %v929
    %v931 = vsel %vm314, %v166, 0.0
    %v932 = vrot.slane %v931, 4
    %v933 = vadd.f32 %v931, %v932
    %v934 = vrot.slane %v933, 2
    %v935 = vadd.f32 %v933, %v934
    %v936 = vrot.slane %v935, 1
    %v937 = vadd.f32 %v935, %v936
    %v938 = vsel %vm314, %v262, 0.0
    %v939 = vrot.slane %v938, 4
    %v940 = vadd.f32 %v938, %v939
    %v941 = vrot.slane %v940, 2
    %v942 = vadd.f32 %v940, %v941
    %v943 = vrot.slane %v942, 1
    %v944 = vadd.f32 %v942, %v943
    %v945 = vsel %vm314, %v167, 0.0
    %v946 = vrot.slane %v945, 4
    %v947 = vadd.f32 %v945, %v946
    %v948 = vrot.slane %v947, 2
    %v949 = vadd.f32 %v947, %v948
    %v950 = vrot.slane %v949, 1
    %v951 = vadd.f32 %v949, %v950
    %v952 = vsel %vm314, %v263, 0.0
    %v953 = vrot.slane %v952, 4
    %v954 = vadd.f32 %v952, %v953
    %v955 = vrot.slane %v954, 2
    %v956 = vadd.f32 %v954, %v955
    %v957 = vrot.slane %v956, 1
    %v958 = vadd.f32 %v956, %v957
    %v959 = vsel %vm314, %v168, 0.0
    %v960 = vrot.slane %v959, 4
    %v961 = vadd.f32 %v959, %v960
    %v962 = vrot.slane %v961, 2
    %v963 = vadd.f32 %v961, %v962
    %v964 = vrot.slane %v963, 1
    %v965 = vadd.f32 %v963, %v964
    %v966 = vsel %vm314, %v264, 0.0
    %v967 = vrot.slane %v966, 4
    %v968 = vadd.f32 %v966, %v967
    %v969 = vrot.slane %v968, 2
    %v970 = vadd.f32 %v968, %v969
    %v971 = vrot.slane %v970, 1
    %v972 = vadd.f32 %v970, %v971
    %v973 = vsel %vm314, %v169, 0.0
    %v974 = vrot.slane %v973, 4
    %v975 = vadd.f32 %v973, %v974
    %v976 = vrot.slane %v975, 2
    %v977 = vadd.f32 %v975, %v976
    %v978 = vrot.slane %v977, 1
    %v979 = vadd.f32 %v977, %v978
    %v980 = vsel %vm314, %v265, 0.0
    %v981 = vrot.slane %v980, 4
    %v982 = vadd.f32 %v980, %v981
    %v983 = vrot.slane %v982, 2
    %v984 = vadd.f32 %v982, %v983
    %v985 = vrot.slane %v984, 1
    %v986 = vadd.f32 %v984, %v985
    %v987 = vrcp.pop 4.0
    %v988 = vmul.f32 %v321, %v987
    %v989 = vmul.f32 %v328, %v987
    %v990 = vmul.f32 %v335, %v987
    %v991 = vmul.f32 %v342, %v987
    %v992 = vmul.f32 %v349, %v987
    %v993 = vmul.f32 %v356, %v987
    %v994 = vmul.f32 %v363, %v987
    %v995 = vmul.f32 %v370, %v987
    %v996 = vmul.f32 %v377, %v987
    %v997 = vmul.f32 %v384, %v987
    %v998 = vmul.f32 %v391, %v987
    %v999 = vmul.f32 %v398, %v987
    %v1000 = vmul.f32 %v405, %v987
    %v1001 = vmul.f32 %v412, %v987
    %v1002 = vmul.f32 %v419, %v987
    %v1003 = vmul.f32 %v426, %v987
    %v1004 = vmul.f32 %v433, %v987
    %v1005 = vmul.f32 %v440, %v987
    %v1006 = vmul.f32 %v447, %v987
    %v1007 = vmul.f32 %v454, %v987
    %v1008 = vmul.f32 %v461, %v987
    %v1009 = vmul.f32 %v468, %v987
    %v1010 = vmul.f32 %v475, %v987
    %v1011 = vmul.f32 %v482, %v987
    %v1012 = vmul.f32 %v489, %v987
    %v1013 = vmul.f32 %v496, %v987
    %v1014 = vmul.f32 %v503, %v987
    %v1015 = vmul.f32 %v510, %v987
    %v1016 = vmul.f32 %v517, %v987
    %v1017 = vmul.f32 %v524, %v987
    %v1018 = vmul.f32 %v531, %v987
    %v1019 = vmul.f32 %v538, %v987
    %v1020 = vmul.f32 %v545, %v987
    %v1021 = vmul.f32 %v552, %v987
    %v1022 = vmul.f32 %v559, %v987
    %v1023 = vmul.f32 %v566, %v987
    %v1024 = vmul.f32 %v573, %v987
    %v1025 = vmul.f32 %v580, %v987
    %v1026 = vmul.f32 %v587, %v987
    %v1027 = vmul.f32 %v594, %v987
    %v1028 = vmul.f32 %v601, %v987
    %v1029 = vmul.f32 %v608, %v987
    %v1030 = vmul.f32 %v615, %v987
    %v1031 = vmul.f32 %v622, %v987
    %v1032 = vmul.f32 %v629, %v987
    %v1033 = vmul.f32 %v636, %v987
    %v1034 = vmul.f32 %v643, %v987
    %v1035 = vmul.f32 %v650, %v987
    %v1036 = vmul.f32 %v657, %v987
    %v1037 = vmul.f32 %v664, %v987
    %v1038 = vmul.f32 %v671, %v987
    %v1039 = vmul.f32 %v678, %v987
    %v1040 = vmul.f32 %v685, %v987
    %v1041 = vmul.f32 %v692, %v987
    %v1042 = vmul.f32 %v699, %v987
    %v1043 = vmul.f32 %v706, %v987
    %v1044 = vmul.f32 %v713, %v987
    %v1045 = vmul.f32 %v720, %v987
    %v1046 = vmul.f32 %v727, %v987
    %v1047 = vmul.f32 %v734, %v987
    %v1048 = vmul.f32 %v741, %v987
    %v1049 = vmul.f32 %v748, %v987
    %v1050 = vmul.f32 %v755, %v987
    %v1051 = vmul.f32 %v762, %v987
    %v1052 = vmul.f32 %v769, %v987
    %v1053 = vmul.f32 %v776, %v987
    %v1054 = vmul.f32 %v783, %v987
    %v1055 = vmul.f32 %v790, %v987
    %v1056 = vmul.f32 %v797, %v987
    %v1057 = vmul.f32 %v804, %v987
    %v1058 = vmul.f32 %v811, %v987
    %v1059 = vmul.f32 %v818, %v987
    %v1060 = vmul.f32 %v825, %v987
    %v1061 = vmul.f32 %v832, %v987
    %v1062 = vmul.f32 %v839, %v987
    %v1063 = vmul.f32 %v846, %v987
    %v1064 = vmul.f32 %v853, %v987
    %v1065 = vmul.f32 %v860, %v987
    %v1066 = vmul.f32 %v867, %v987
    %v1067 = vmul.f32 %v874, %v987
    %v1068 = vmul.f32 %v881, %v987
    %v1069 = vmul.f32 %v888, %v987
    %v1070 = vmul.f32 %v895, %v987
    %v1071 = vmul.f32 %v902, %v987
    %v1072 = vmul.f32 %v909, %v987
    %v1073 = vmul.f32 %v916, %v987
    %v1074 = vmul.f32 %v923, %v987
    %v1075 = vmul.f32 %v930, %v987
    %v1076 = vmul.f32 %v937, %v987
    %v1077 = vmul.f32 %v944, %v987
    %v1078 = vmul.f32 %v951, %v987
    %v1079 = vmul.f32 %v958, %v987
    %v1080 = vmul.f32 %v965, %v987
    %v1081 = vmul.f32 %v972, %v987
    %v1082 = vmul.f32 %v979, %v987
    %v1083 = vmul.f32 %v986, %v987
    %v1084 = vld [vmem:[#allocation5] sm:$0xff]
    %v1085 = vld [vmem:[#allocation5 + $0x8] sm:$0xff]
    %v1086 = vld [vmem:[#allocation5 + $0x10] sm:$0xff]
    %v1087 = vld [vmem:[#allocation5 + $0x18] sm:$0xff]
    %v1088 = vld [vmem:[#allocation5 + $0x20] sm:$0xff]
    %v1089 = vld [vmem:[#allocation5 + $0x28] sm:$0xff]
    %v1090 = vld [vmem:[#allocation5 + $0x30] sm:$0xff]
    %v1091 = vld [vmem:[#allocation5 + $0x38] sm:$0xff]
    %v1092 = vld [vmem:[#allocation5 + $0x40] sm:$0xff]
    %v1093 = vld [vmem:[#allocation5 + $0x48] sm:$0xff]
    %v1094 = vld [vmem:[#allocation5 + $0x50] sm:$0xff]
    %v1095 = vld [vmem:[#allocation5 + $0x58] sm:$0xff]
    %v1096 = vld [vmem:[#allocation5 + $0x60] sm:$0xff]
    %v1097 = vld [vmem:[#allocation5 + $0x68] sm:$0xff]
    %v1098 = vld [vmem:[#allocation5 + $0x70] sm:$0xff]
    %v1099 = vld [vmem:[#allocation5 + $0x78] sm:$0xff]
    %v1100 = vld [vmem:[#allocation5 + $0x80] sm:$0xff]
    %v1101 = vld [vmem:[#allocation5 + $0x88] sm:$0xff]
    %v1102 = vld [vmem:[#allocation5 + $0x90] sm:$0xff]
    %v1103 = vld [vmem:[#allocation5 + $0x98] sm:$0xff]
    %v1104 = vld [vmem:[#allocation5 + $0xa0] sm:$0xff]
    %v1105 = vld [vmem:[#allocation5 + $0xa8] sm:$0xff]
    %v1106 = vld [vmem:[#allocation5 + $0xb0] sm:$0xff]
    %v1107 = vld [vmem:[#allocation5 + $0xb8] sm:$0xff]
    %v1108 = vld [vmem:[#allocation5 + $0xc0] sm:$0xff]
    %v1109 = vld [vmem:[#allocation5 + $0xc8] sm:$0xff]
    %v1110 = vld [vmem:[#allocation5 + $0xd0] sm:$0xff]
    %v1111 = vld [vmem:[#allocation5 + $0xd8] sm:$0xff]
    %v1112 = vld [vmem:[#allocation5 + $0xe0] sm:$0xff]
    %v1113 = vld [vmem:[#allocation5 + $0xe8] sm:$0xff]
    %v1114 = vld [vmem:[#allocation5 + $0xf0] sm:$0xff]
    %v1115 = vld [vmem:[#allocation5 + $0xf8] sm:$0xff]
    %v1116 = vld [vmem:[#allocation5 + $0x100] sm:$0xff]
    %v1117 = vld [vmem:[#allocation5 + $0x108] sm:$0xff]
    %v1118 = vld [vmem:[#allocation5 + $0x110] sm:$0xff]
    %v1119 = vld [vmem:[#allocation5 + $0x118] sm:$0xff]
    %v1120 = vld [vmem:[#allocation5 + $0x120] sm:$0xff]
    %v1121 = vld [vmem:[#allocation5 + $0x128] sm:$0xff]
    %v1122 = vld [vmem:[#allocation5 + $0x130] sm:$0xff]
    %v1123 = vld [vmem:[#allocation5 + $0x138] sm:$0xff]
    %v1124 = vld [vmem:[#allocation5 + $0x140] sm:$0xff]
    %v1125 = vld [vmem:[#allocation5 + $0x148] sm:$0xff]
    %v1126 = vld [vmem:[#allocation5 + $0x150] sm:$0xff]
    %v1127 = vld [vmem:[#allocation5 + $0x158] sm:$0xff]
    %v1128 = vld [vmem:[#allocation5 + $0x160] sm:$0xff]
    %v1129 = vld [vmem:[#allocation5 + $0x168] sm:$0xff]
    %v1130 = vld [vmem:[#allocation5 + $0x170] sm:$0xff]
    %v1131 = vld [vmem:[#allocation5 + $0x178] sm:$0xff]
    %v1132 = vld [vmem:[#allocation5 + $0x180] sm:$0xff]
    %v1133 = vld [vmem:[#allocation5 + $0x188] sm:$0xff]
    %v1134 = vld [vmem:[#allocation5 + $0x190] sm:$0xff]
    %v1135 = vld [vmem:[#allocation5 + $0x198] sm:$0xff]
    %v1136 = vld [vmem:[#allocation5 + $0x1a0] sm:$0xff]
    %v1137 = vld [vmem:[#allocation5 + $0x1a8] sm:$0xff]
    %v1138 = vld [vmem:[#allocation5 + $0x1b0] sm:$0xff]
    %v1139 = vld [vmem:[#allocation5 + $0x1b8] sm:$0xff]
    %v1140 = vld [vmem:[#allocation5 + $0x1c0] sm:$0xff]
    %v1141 = vld [vmem:[#allocation5 + $0x1c8] sm:$0xff]
    %v1142 = vld [vmem:[#allocation5 + $0x1d0] sm:$0xff]
    %v1143 = vld [vmem:[#allocation5 + $0x1d8] sm:$0xff]
    %v1144 = vld [vmem:[#allocation5 + $0x1e0] sm:$0xff]
    %v1145 = vld [vmem:[#allocation5 + $0x1e8] sm:$0xff]
    %v1146 = vld [vmem:[#allocation5 + $0x1f0] sm:$0xff]
    %v1147 = vld [vmem:[#allocation5 + $0x1f8] sm:$0xff]
    %v1148 = vld [vmem:[#allocation5 + $0x200] sm:$0xff]
    %v1149 = vld [vmem:[#allocation5 + $0x208] sm:$0xff]
    %v1150 = vld [vmem:[#allocation5 + $0x210] sm:$0xff]
    %v1151 = vld [vmem:[#allocation5 + $0x218] sm:$0xff]
    %v1152 = vld [vmem:[#allocation5 + $0x220] sm:$0xff]
    %v1153 = vld [vmem:[#allocation5 + $0x228] sm:$0xff]
    %v1154 = vld [vmem:[#allocation5 + $0x230] sm:$0xff]
    %v1155 = vld [vmem:[#allocation5 + $0x238] sm:$0xff]
    %v1156 = vld [vmem:[#allocation5 + $0x240] sm:$0xff]
    %v1157 = vld [vmem:[#allocation5 + $0x248] sm:$0xff]
    %v1158 = vld [vmem:[#allocation5 + $0x250] sm:$0xff]
    %v1159 = vld [vmem:[#allocation5 + $0x258] sm:$0xff]
    %v1160 = vld [vmem:[#allocation5 + $0x260] sm:$0xff]
    %v1161 = vld [vmem:[#allocation5 + $0x268] sm:$0xff]
    %v1162 = vld [vmem:[#allocation5 + $0x270] sm:$0xff]
    %v1163 = vld [vmem:[#allocation5 + $0x278] sm:$0xff]
    %v1164 = vld [vmem:[#allocation5 + $0x280] sm:$0xff]
    %v1165 = vld [vmem:[#allocation5 + $0x288] sm:$0xff]
    %v1166 = vld [vmem:[#allocation5 + $0x290] sm:$0xff]
    %v1167 = vld [vmem:[#allocation5 + $0x298] sm:$0xff]
    %v1168 = vld [vmem:[#allocation5 + $0x2a0] sm:$0xff]
    %v1169 = vld [vmem:[#allocation5 + $0x2a8] sm:$0xff]
    %v1170 = vld [vmem:[#allocation5 + $0x2b0] sm:$0xff]
    %v1171 = vld [vmem:[#allocation5 + $0x2b8] sm:$0xff]
    %v1172 = vld [vmem:[#allocation5 + $0x2c0] sm:$0xff]
    %v1173 = vld [vmem:[#allocation5 + $0x2c8] sm:$0xff]
    %v1174 = vld [vmem:[#allocation5 + $0x2d0] sm:$0xff]
    %v1175 = vld [vmem:[#allocation5 + $0x2d8] sm:$0xff]
    %v1176 = vld [vmem:[#allocation5 + $0x2e0] sm:$0xff]
    %v1177 = vld [vmem:[#allocation5 + $0x2e8] sm:$0xff]
    %v1178 = vld [vmem:[#allocation5 + $0x2f0] sm:$0xff]
    %v1179 = vld [vmem:[#allocation5 + $0x2f8] sm:$0xff]
    %v1180 = vld [vmem:[%s2] sm:$0x1]
    %v1181 = vld [vmem:[#allocation7] sm:$0xff]
    %v1182 = vld [vmem:[#allocation7 + $0x8] sm:$0xff]
    %v1183 = vld [vmem:[#allocation7 + $0x10] sm:$0xff]
    %v1184 = vld [vmem:[#allocation7 + $0x18] sm:$0xff]
    %v1185 = vld [vmem:[#allocation7 + $0x20] sm:$0xff]
    %v1186 = vld [vmem:[#allocation7 + $0x28] sm:$0xff]
    %v1187 = vld [vmem:[#allocation7 + $0x30] sm:$0xff]
    %v1188 = vld [vmem:[#allocation7 + $0x38] sm:$0xff]
    %v1189 = vld [vmem:[#allocation7 + $0x40] sm:$0xff]
    %v1190 = vld [vmem:[#allocation7 + $0x48] sm:$0xff]
    %v1191 = vld [vmem:[#allocation7 + $0x50] sm:$0xff]
    %v1192 = vld [vmem:[#allocation7 + $0x58] sm:$0xff]
    %v1193 = vld [vmem:[#allocation7 + $0x60] sm:$0xff]
    %v1194 = vld [vmem:[#allocation7 + $0x68] sm:$0xff]
    %v1195 = vld [vmem:[#allocation7 + $0x70] sm:$0xff]
    %v1196 = vld [vmem:[#allocation7 + $0x78] sm:$0xff]
    %v1197 = vld [vmem:[%s4] sm:$0x1]
    %v1198 = vld [vmem:[%s5] sm:$0x1]
    %v1199 = vld [vmem:[#allocation8] sm:$0xff]
    %v1200 = vld [vmem:[#allocation8 + $0x8] sm:$0xff]
    %v1201 = vld [vmem:[#allocation8 + $0x10] sm:$0xff]
    %v1202 = vld [vmem:[#allocation8 + $0x18] sm:$0xff]
    %v1203 = vld [vmem:[#allocation8 + $0x20] sm:$0xff]
    %v1204 = vld [vmem:[#allocation8 + $0x28] sm:$0xff]
    %v1205 = vld [vmem:[#allocation8 + $0x30] sm:$0xff]
    %v1206 = vld [vmem:[#allocation8 + $0x38] sm:$0xff]
    %v1207 = vld [vmem:[#allocation8 + $0x40] sm:$0xff]
    %v1208 = vld [vmem:[#allocation8 + $0x48] sm:$0xff]
    %v1209 = vld [vmem:[#allocation8 + $0x50] sm:$0xff]
    %v1210 = vld [vmem:[#allocation8 + $0x58] sm:$0xff]
    %v1211 = vld [vmem:[#allocation8 + $0x60] sm:$0xff]
    %v1212 = vld [vmem:[#allocation8 + $0x68] sm:$0xff]
    %v1213 = vld [vmem:[#allocation8 + $0x70] sm:$0xff]
    %v1214 = vld [vmem:[#allocation8 + $0x78] sm:$0xff]
    %v1215 = vpack.c.bf16 %v988, %v988
    %v1216 = vpack.c.bf16 %v989, %v989
    %v1217 = vpack.c.bf16 %v990, %v990
    %v1218 = vpack.c.bf16 %v991, %v991
    %v1219 = vpack.c.bf16 %v992, %v992
    %v1220 = vpack.c.bf16 %v993, %v993
    %v1221 = vpack.c.bf16 %v994, %v994
    %v1222 = vpack.c.bf16 %v995, %v995
    %v1223 = vpack.c.bf16 %v996, %v996
    %v1224 = vpack.c.bf16 %v997, %v997
    %v1225 = vpack.c.bf16 %v998, %v998
    %v1226 = vpack.c.bf16 %v999, %v999
    %v1227 = vpack.c.bf16 %v1000, %v1000
    %v1228 = vpack.c.bf16 %v1001, %v1001
    %v1229 = vpack.c.bf16 %v1002, %v1002
    %v1230 = vpack.c.bf16 %v1003, %v1003
    %v1231 = vpack.c.bf16 %v1004, %v1004
    %v1232 = vpack.c.bf16 %v1005, %v1005
    %v1233 = vpack.c.bf16 %v1006, %v1006
    %v1234 = vpack.c.bf16 %v1007, %v1007
    %v1235 = vpack.c.bf16 %v1008, %v1008
    %v1236 = vpack.c.bf16 %v1009, %v1009
    %v1237 = vpack.c.bf16 %v1010, %v1010
    %v1238 = vpack.c.bf16 %v1011, %v1011
    %v1239 = vpack.c.bf16 %v1012, %v1012
    %v1240 = vpack.c.bf16 %v1013, %v1013
    %v1241 = vpack.c.bf16 %v1014, %v1014
    %v1242 = vpack.c.bf16 %v1015, %v1015
    %v1243 = vpack.c.bf16 %v1016, %v1016
    %v1244 = vpack.c.bf16 %v1017, %v1017
    %v1245 = vpack.c.bf16 %v1018, %v1018
    %v1246 = vpack.c.bf16 %v1019, %v1019
    %v1247 = vpack.c.bf16 %v1020, %v1020
    %v1248 = vpack.c.bf16 %v1021, %v1021
    %v1249 = vpack.c.bf16 %v1022, %v1022
    %v1250 = vpack.c.bf16 %v1023, %v1023
    %v1251 = vpack.c.bf16 %v1024, %v1024
    %v1252 = vpack.c.bf16 %v1025, %v1025
    %v1253 = vpack.c.bf16 %v1026, %v1026
    %v1254 = vpack.c.bf16 %v1027, %v1027
    %v1255 = vpack.c.bf16 %v1028, %v1028
    %v1256 = vpack.c.bf16 %v1029, %v1029
    %v1257 = vpack.c.bf16 %v1030, %v1030
    %v1258 = vpack.c.bf16 %v1031, %v1031
    %v1259 = vpack.c.bf16 %v1032, %v1032
    %v1260 = vpack.c.bf16 %v1033, %v1033
    %v1261 = vpack.c.bf16 %v1034, %v1034
    %v1262 = vpack.c.bf16 %v1035, %v1035
    %v1263 = vpack.c.bf16 %v1036, %v1036
    %v1264 = vpack.c.bf16 %v1037, %v1037
    %v1265 = vpack.c.bf16 %v1038, %v1038
    %v1266 = vpack.c.bf16 %v1039, %v1039
    %v1267 = vpack.c.bf16 %v1040, %v1040
    %v1268 = vpack.c.bf16 %v1041, %v1041
    %v1269 = vpack.c.bf16 %v1042, %v1042
    %v1270 = vpack.c.bf16 %v1043, %v1043
    %v1271 = vpack.c.bf16 %v1044, %v1044
    %v1272 = vpack.c.bf16 %v1045, %v1045
    %v1273 = vpack.c.bf16 %v1046, %v1046
    %v1274 = vpack.c.bf16 %v1047, %v1047
    %v1275 = vpack.c.bf16 %v1048, %v1048
    %v1276 = vpack.c.bf16 %v1049, %v1049
    %v1277 = vpack.c.bf16 %v1050, %v1050
    %v1278 = vpack.c.bf16 %v1051, %v1051
    %v1279 = vpack.c.bf16 %v1052, %v1052
    %v1280 = vpack.c.bf16 %v1053, %v1053
    %v1281 = vpack.c.bf16 %v1054, %v1054
    %v1282 = vpack.c.bf16 %v1055, %v1055
    %v1283 = vpack.c.bf16 %v1056, %v1056
    %v1284 = vpack.c.bf16 %v1057, %v1057
    %v1285 = vpack.c.bf16 %v1058, %v1058
    %v1286 = vpack.c.bf16 %v1059, %v1059
    %v1287 = vpack.c.bf16 %v1060, %v1060
    %v1288 = vpack.c.bf16 %v1061, %v1061
    %v1289 = vpack.c.bf16 %v1062, %v1062
    %v1290 = vpack.c.bf16 %v1063, %v1063
    %v1291 = vpack.c.bf16 %v1064, %v1064
    %v1292 = vpack.c.bf16 %v1065, %v1065
    %v1293 = vpack.c.bf16 %v1066, %v1066
    %v1294 = vpack.c.bf16 %v1067, %v1067
    %v1295 = vpack.c.bf16 %v1068, %v1068
    %v1296 = vpack.c.bf16 %v1069, %v1069
    %v1297 = vpack.c.bf16 %v1070, %v1070
    %v1298 = vpack.c.bf16 %v1071, %v1071
    %v1299 = vpack.c.bf16 %v1072, %v1072
    %v1300 = vpack.c.bf16 %v1073, %v1073
    %v1301 = vpack.c.bf16 %v1074, %v1074
    %v1302 = vpack.c.bf16 %v1075, %v1075
    %v1303 = vpack.c.bf16 %v1076, %v1076
    %v1304 = vpack.c.bf16 %v1077, %v1077
    %v1305 = vpack.c.bf16 %v1078, %v1078
    %v1306 = vpack.c.bf16 %v1079, %v1079
    %v1307 = vpack.c.bf16 %v1080, %v1080
    %v1308 = vpack.c.bf16 %v1081, %v1081
    %v1309 = vpack.c.bf16 %v1082, %v1082
    %v1310 = vpack.c.bf16 %v1083, %v1083
    %v1311 = vpack.c.bf16 %v1085, %v1084
    %v1312 = vpack.c.bf16 %v1087, %v1086
    %v1313 = vpack.c.bf16 %v1089, %v1088
    %v1314 = vpack.c.bf16 %v1091, %v1090
    %v1315 = vpack.c.bf16 %v1093, %v1092
    %v1316 = vpack.c.bf16 %v1095, %v1094
    %v1317 = vpack.c.bf16 %v1097, %v1096
    %v1318 = vpack.c.bf16 %v1099, %v1098
    %v1319 = vpack.c.bf16 %v1101, %v1100
    %v1320 = vpack.c.bf16 %v1103, %v1102
    %v1321 = vpack.c.bf16 %v1105, %v1104
    %v1322 = vpack.c.bf16 %v1107, %v1106
    %v1323 = vpack.c.bf16 %v1109, %v1108
    %v1324 = vpack.c.bf16 %v1111, %v1110
    %v1325 = vpack.c.bf16 %v1113, %v1112
    %v1326 = vpack.c.bf16 %v1115, %v1114
    %v1327 = vpack.c.bf16 %v1117, %v1116
    %v1328 = vpack.c.bf16 %v1119, %v1118
    %v1329 = vpack.c.bf16 %v1121, %v1120
    %v1330 = vpack.c.bf16 %v1123, %v1122
    %v1331 = vpack.c.bf16 %v1125, %v1124
    %v1332 = vpack.c.bf16 %v1127, %v1126
    %v1333 = vpack.c.bf16 %v1129, %v1128
    %v1334 = vpack.c.bf16 %v1131, %v1130
    %v1335 = vpack.c.bf16 %v1133, %v1132
    %v1336 = vpack.c.bf16 %v1135, %v1134
    %v1337 = vpack.c.bf16 %v1137, %v1136
    %v1338 = vpack.c.bf16 %v1139, %v1138
    %v1339 = vpack.c.bf16 %v1141, %v1140
    %v1340 = vpack.c.bf16 %v1143, %v1142
    %v1341 = vpack.c.bf16 %v1145, %v1144
    %v1342 = vpack.c.bf16 %v1147, %v1146
    %v1343 = vpack.c.bf16 %v1149, %v1148
    %v1344 = vpack.c.bf16 %v1151, %v1150
    %v1345 = vpack.c.bf16 %v1153, %v1152
    %v1346 = vpack.c.bf16 %v1155, %v1154
    %v1347 = vpack.c.bf16 %v1157, %v1156
    %v1348 = vpack.c.bf16 %v1159, %v1158
    %v1349 = vpack.c.bf16 %v1161, %v1160
    %v1350 = vpack.c.bf16 %v1163, %v1162
    %v1351 = vpack.c.bf16 %v1165, %v1164
    %v1352 = vpack.c.bf16 %v1167, %v1166
    %v1353 = vpack.c.bf16 %v1169, %v1168
    %v1354 = vpack.c.bf16 %v1171, %v1170
    %v1355 = vpack.c.bf16 %v1173, %v1172
    %v1356 = vpack.c.bf16 %v1175, %v1174
    %v1357 = vpack.c.bf16 %v1177, %v1176
    %v1358 = vpack.c.bf16 %v1179, %v1178
    %v1360 = vlaneseq
    %v1361 = vshrl.u32 %v1360, 7
    %v1362 = vsub.s32 0, %v1361
    %v1363 = vrot.slane %v1180, %v1362
    %v1461 = vunpack.c.l.b16 %v1215
    %v1462 = vunpack.c.l.b16 %v1216
    %v1463 = vunpack.c.l.b16 %v1217
    %v1464 = vunpack.c.l.b16 %v1218
    %v1465 = vunpack.c.l.b16 %v1219
    %v1466 = vunpack.c.l.b16 %v1220
    %v1467 = vunpack.c.l.b16 %v1221
    %v1468 = vunpack.c.l.b16 %v1222
    %v1469 = vunpack.c.l.b16 %v1223
    %v1470 = vunpack.c.l.b16 %v1224
    %v1471 = vunpack.c.l.b16 %v1225
    %v1472 = vunpack.c.l.b16 %v1226
    %v1473 = vunpack.c.l.b16 %v1227
    %v1474 = vunpack.c.l.b16 %v1228
    %v1475 = vunpack.c.l.b16 %v1229
    %v1476 = vunpack.c.l.b16 %v1230
    %v1477 = vunpack.c.l.b16 %v1231
    %v1478 = vunpack.c.l.b16 %v1232
    %v1479 = vunpack.c.l.b16 %v1233
    %v1480 = vunpack.c.l.b16 %v1234
    %v1481 = vunpack.c.l.b16 %v1235
    %v1482 = vunpack.c.l.b16 %v1236
    %v1483 = vunpack.c.l.b16 %v1237
    %v1484 = vunpack.c.l.b16 %v1238
    %v1485 = vunpack.c.l.b16 %v1239
    %v1486 = vunpack.c.l.b16 %v1240
    %v1487 = vunpack.c.l.b16 %v1241
    %v1488 = vunpack.c.l.b16 %v1242
    %v1489 = vunpack.c.l.b16 %v1243
    %v1490 = vunpack.c.l.b16 %v1244
    %v1491 = vunpack.c.l.b16 %v1245
    %v1492 = vunpack.c.l.b16 %v1246
    %v1493 = vunpack.c.l.b16 %v1247
    %v1494 = vunpack.c.l.b16 %v1248
    %v1495 = vunpack.c.l.b16 %v1249
    %v1496 = vunpack.c.l.b16 %v1250
    %v1497 = vunpack.c.l.b16 %v1251
    %v1498 = vunpack.c.l.b16 %v1252
    %v1499 = vunpack.c.l.b16 %v1253
    %v1500 = vunpack.c.l.b16 %v1254
    %v1501 = vunpack.c.l.b16 %v1255
    %v1502 = vunpack.c.l.b16 %v1256
    %v1503 = vunpack.c.l.b16 %v1257
    %v1504 = vunpack.c.l.b16 %v1258
    %v1505 = vunpack.c.l.b16 %v1259
    %v1506 = vunpack.c.l.b16 %v1260
    %v1507 = vunpack.c.l.b16 %v1261
    %v1508 = vunpack.c.l.b16 %v1262
    %v1509 = vunpack.c.l.b16 %v1263
    %v1510 = vunpack.c.l.b16 %v1264
    %v1511 = vunpack.c.l.b16 %v1265
    %v1512 = vunpack.c.l.b16 %v1266
    %v1513 = vunpack.c.l.b16 %v1267
    %v1514 = vunpack.c.l.b16 %v1268
    %v1515 = vunpack.c.l.b16 %v1269
    %v1516 = vunpack.c.l.b16 %v1270
    %v1517 = vunpack.c.l.b16 %v1271
    %v1518 = vunpack.c.l.b16 %v1272
    %v1519 = vunpack.c.l.b16 %v1273
    %v1520 = vunpack.c.l.b16 %v1274
    %v1521 = vunpack.c.l.b16 %v1275
    %v1522 = vunpack.c.l.b16 %v1276
    %v1523 = vunpack.c.l.b16 %v1277
    %v1524 = vunpack.c.l.b16 %v1278
    %v1525 = vunpack.c.l.b16 %v1279
    %v1526 = vunpack.c.l.b16 %v1280
    %v1527 = vunpack.c.l.b16 %v1281
    %v1528 = vunpack.c.l.b16 %v1282
    %v1529 = vunpack.c.l.b16 %v1283
    %v1530 = vunpack.c.l.b16 %v1284
    %v1531 = vunpack.c.l.b16 %v1285
    %v1532 = vunpack.c.l.b16 %v1286
    %v1533 = vunpack.c.l.b16 %v1287
    %v1534 = vunpack.c.l.b16 %v1288
    %v1535 = vunpack.c.l.b16 %v1289
    %v1536 = vunpack.c.l.b16 %v1290
    %v1537 = vunpack.c.l.b16 %v1291
    %v1538 = vunpack.c.l.b16 %v1292
    %v1539 = vunpack.c.l.b16 %v1293
    %v1540 = vunpack.c.l.b16 %v1294
    %v1541 = vunpack.c.l.b16 %v1295
    %v1542 = vunpack.c.l.b16 %v1296
    %v1543 = vunpack.c.l.b16 %v1297
    %v1544 = vunpack.c.l.b16 %v1298
    %v1545 = vunpack.c.l.b16 %v1299
    %v1546 = vunpack.c.l.b16 %v1300
    %v1547 = vunpack.c.l.b16 %v1301
    %v1548 = vunpack.c.l.b16 %v1302
    %v1549 = vunpack.c.l.b16 %v1303
    %v1550 = vunpack.c.l.b16 %v1304
    %v1551 = vunpack.c.l.b16 %v1305
    %v1552 = vunpack.c.l.b16 %v1306
    %v1553 = vunpack.c.l.b16 %v1307
    %v1554 = vunpack.c.l.b16 %v1308
    %v1555 = vunpack.c.l.b16 %v1309
    %v1556 = vunpack.c.l.b16 %v1310
    %vm1557 = vcmask 1041409
    %v1558 = vsel %vm1557, %v1467, %v1461
    %vm1559 = vcmask 1042434
    %v1560 = vsel %vm1559, %v1473, %v1558
    %vm1561 = vcmask 1043459
    %v1562 = vsel %vm1561, %v1479, %v1560
    %vm1563 = vcmask 1044484
    %v1564 = vsel %vm1563, %v1485, %v1562
    %vm1565 = vcmask 1045509
    %v1566 = vsel %vm1565, %v1491, %v1564
    %vm1567 = vcmask 1046534
    %v1568 = vsel %vm1567, %v1497, %v1566
    %vm1569 = vcmask 1047559
    %v1570 = vsel %vm1569, %v1503, %v1568
    %v1571 = vsel %vm1557, %v1468, %v1462
    %v1572 = vsel %vm1559, %v1474, %v1571
    %v1573 = vsel %vm1561, %v1480, %v1572
    %v1574 = vsel %vm1563, %v1486, %v1573
    %v1575 = vsel %vm1565, %v1492, %v1574
    %v1576 = vsel %vm1567, %v1498, %v1575
    %v1577 = vsel %vm1569, %v1504, %v1576
    %v1578 = vsel %vm1557, %v1469, %v1463
    %v1579 = vsel %vm1559, %v1475, %v1578
    %v1580 = vsel %vm1561, %v1481, %v1579
    %v1581 = vsel %vm1563, %v1487, %v1580
    %v1582 = vsel %vm1565, %v1493, %v1581
    %v1583 = vsel %vm1567, %v1499, %v1582
    %v1584 = vsel %vm1569, %v1505, %v1583
    %v1585 = vsel %vm1557, %v1470, %v1464
    %v1586 = vsel %vm1559, %v1476, %v1585
    %v1587 = vsel %vm1561, %v1482, %v1586
    %v1588 = vsel %vm1563, %v1488, %v1587
    %v1589 = vsel %vm1565, %v1494, %v1588
    %v1590 = vsel %vm1567, %v1500, %v1589
    %v1591 = vsel %vm1569, %v1506, %v1590
    %v1592 = vsel %vm1557, %v1471, %v1465
    %v1593 = vsel %vm1559, %v1477, %v1592
    %v1594 = vsel %vm1561, %v1483, %v1593
    %v1595 = vsel %vm1563, %v1489, %v1594
    %v1596 = vsel %vm1565, %v1495, %v1595
    %v1597 = vsel %vm1567, %v1501, %v1596
    %v1598 = vsel %vm1569, %v1507, %v1597
    %v1599 = vsel %vm1557, %v1472, %v1466
    %v1600 = vsel %vm1559, %v1478, %v1599
    %v1601 = vsel %vm1561, %v1484, %v1600
    %v1602 = vsel %vm1563, %v1490, %v1601
    %v1603 = vsel %vm1565, %v1496, %v1602
    %v1604 = vsel %vm1567, %v1502, %v1603
    %v1605 = vsel %vm1569, %v1508, %v1604
    %v1606 = vsel %vm1557, %v1515, %v1509
    %v1607 = vsel %vm1559, %v1521, %v1606
    %v1608 = vsel %vm1561, %v1527, %v1607
    %v1609 = vsel %vm1563, %v1533, %v1608
    %v1610 = vsel %vm1565, %v1539, %v1609
    %v1611 = vsel %vm1567, %v1545, %v1610
    %v1612 = vsel %vm1569, %v1551, %v1611
    %v1613 = vsel %vm1557, %v1516, %v1510
    %v1614 = vsel %vm1559, %v1522, %v1613
    %v1615 = vsel %vm1561, %v1528, %v1614
    %v1616 = vsel %vm1563, %v1534, %v1615
    %v1617 = vsel %vm1565, %v1540, %v1616
    %v1618 = vsel %vm1567, %v1546, %v1617
    %v1619 = vsel %vm1569, %v1552, %v1618
    %v1620 = vsel %vm1557, %v1517, %v1511
    %v1621 = vsel %vm1559, %v1523, %v1620
    %v1622 = vsel %vm1561, %v1529, %v1621
    %v1623 = vsel %vm1563, %v1535, %v1622
    %v1624 = vsel %vm1565, %v1541, %v1623
    %v1625 = vsel %vm1567, %v1547, %v1624
    %v1626 = vsel %vm1569, %v1553, %v1625
    %v1627 = vsel %vm1557, %v1518, %v1512
    %v1628 = vsel %vm1559, %v1524, %v1627
    %v1629 = vsel %vm1561, %v1530, %v1628
    %v1630 = vsel %vm1563, %v1536, %v1629
    %v1631 = vsel %vm1565, %v1542, %v1630
    %v1632 = vsel %vm1567, %v1548, %v1631
    %v1633 = vsel %vm1569, %v1554, %v1632
    %v1634 = vsel %vm1557, %v1519, %v1513
    %v1635 = vsel %vm1559, %v1525, %v1634
    %v1636 = vsel %vm1561, %v1531, %v1635
    %v1637 = vsel %vm1563, %v1537, %v1636
    %v1638 = vsel %vm1565, %v1543, %v1637
    %v1639 = vsel %vm1567, %v1549, %v1638
    %v1640 = vsel %vm1569, %v1555, %v1639
    %v1641 = vsel %vm1557, %v1520, %v1514
    %v1642 = vsel %vm1559, %v1526, %v1641
    %v1643 = vsel %vm1561, %v1532, %v1642
    %v1644 = vsel %vm1563, %v1538, %v1643
    %v1645 = vsel %vm1565, %v1544, %v1644
    %v1646 = vsel %vm1567, %v1550, %v1645
    %v1647 = vsel %vm1569, %v1556, %v1646
    %v1648 = vpack.c.b16 %v1612, %v1570
    %v1649 = vpack.c.b16 %v1619, %v1577
    %v1650 = vpack.c.b16 %v1626, %v1584
    %v1651 = vpack.c.b16 %v1633, %v1591
    %v1652 = vpack.c.b16 %v1640, %v1598
    %v1653 = vpack.c.b16 %v1647, %v1605
    %1660 = vmatprep.subr.bf16.mxu0 0
    %1661 = vmatpush1.bf16.msra.mxu0 %v1318
    %1662 = vmatprep.subr.bf16.mxu0 0
    %1663 = vmatpush1.bf16.msra.mxu0 %v1317
    %1664 = vmatprep.subr.bf16.mxu0 0
    %1665 = vmatpush1.bf16.msra.mxu0 %v1316
    %1666 = vmatprep.subr.bf16.mxu0 0
    %1667 = vmatpush1.bf16.msra.mxu0 %v1315
    %1668 = vmatprep.subr.bf16.mxu0 0
    %1669 = vmatpush1.bf16.msra.mxu0 %v1314
    %1670 = vmatprep.subr.bf16.mxu0 0
    %1671 = vmatpush1.bf16.msra.mxu0 %v1313
    %1672 = vmatprep.subr.bf16.mxu0 0
    %1673 = vmatpush1.bf16.msra.mxu0 %v1312
    %1674 = vmatprep.subr.bf16.mxu0 0
    %1675 = vmatpush1.bf16.msra.mxu0 %v1311
    %1676 = vmatprep.subr.bf16.mxu0 0
    %1677 = vmatpush2.bf16.msra.mxu0 %v1326
    %1678 = vmatprep.subr.bf16.mxu0 0
    %1679 = vmatpush2.bf16.msra.mxu0 %v1325
    %1680 = vmatprep.subr.bf16.mxu0 0
    %1681 = vmatpush2.bf16.msra.mxu0 %v1324
    %1682 = vmatprep.subr.bf16.mxu0 0
    %1683 = vmatpush2.bf16.msra.mxu0 %v1323
    %1684 = vmatprep.subr.bf16.mxu0 0
    %1685 = vmatpush2.bf16.msra.mxu0 %v1322
    %1686 = vmatprep.subr.bf16.mxu0 0
    %1687 = vmatpush2.bf16.msra.mxu0 %v1321
    %1688 = vmatprep.subr.bf16.mxu0 0
    %1689 = vmatpush2.bf16.msra.mxu0 %v1320
    %1690 = vmatprep.subr.bf16.mxu0 0
    %1691 = vmatpush2.bf16.msra.mxu0 %v1319
    %1692 = vmatprep.mubr.bf16.mxu0 %v1649
    %1693 = vmatmul.mubr.bf16.gmra.mxu0 %v1648
    %v1694 = vpop.f32.mrf.mxu0
    %v1695 = vadd.f32 %v1363, %v1694
    %v1696 = vpop.f32.mrf.mxu0
    %v1697 = vpop.f32.mrf.mxu0
    %v1698 = vadd.f32 %v1363, %v1697
    %v1699 = vpop.f32.mrf.mxu0
    %1700 = vdwg.mxu0
    %1701 = vmatprep.subr.bf16.mxu0 0
    %1702 = vmatpush1.bf16.msra.mxu0 %v1334
    %1703 = vmatprep.subr.bf16.mxu0 0
    %1704 = vmatpush1.bf16.msra.mxu0 %v1333
    %1705 = vmatprep.subr.bf16.mxu0 0
    %1706 = vmatpush1.bf16.msra.mxu0 %v1332
    %1707 = vmatprep.subr.bf16.mxu0 0
    %1708 = vmatpush1.bf16.msra.mxu0 %v1331
    %1709 = vmatprep.subr.bf16.mxu0 0
    %1710 = vmatpush1.bf16.msra.mxu0 %v1330
    %1711 = vmatprep.subr.bf16.mxu0 0
    %1712 = vmatpush1.bf16.msra.mxu0 %v1329
    %1713 = vmatprep.subr.bf16.mxu0 0
    %1714 = vmatpush1.bf16.msra.mxu0 %v1328
    %1715 = vmatprep.subr.bf16.mxu0 0
    %1716 = vmatpush1.bf16.msra.mxu0 %v1327
    %1717 = vmatprep.subr.bf16.mxu0 0
    %1718 = vmatpush2.bf16.msra.mxu0 %v1342
    %1719 = vmatprep.subr.bf16.mxu0 0
    %1720 = vmatpush2.bf16.msra.mxu0 %v1341
    %1721 = vmatprep.subr.bf16.mxu0 0
    %1722 = vmatpush2.bf16.msra.mxu0 %v1340
    %1723 = vmatprep.subr.bf16.mxu0 0
    %1724 = vmatpush2.bf16.msra.mxu0 %v1339
    %1725 = vmatprep.subr.bf16.mxu0 0
    %1726 = vmatpush2.bf16.msra.mxu0 %v1338
    %1727 = vmatprep.subr.bf16.mxu0 0
    %1728 = vmatpush2.bf16.msra.mxu0 %v1337
    %1729 = vmatprep.subr.bf16.mxu0 0
    %1730 = vmatpush2.bf16.msra.mxu0 %v1336
    %1731 = vmatprep.subr.bf16.mxu0 0
    %1732 = vmatpush2.bf16.msra.mxu0 %v1335
    %1733 = vmatprep.mubr.bf16.mxu0 %v1651
    %1734 = vmatmul.mubr.bf16.gmra.mxu0 %v1650
    %v1735 = vpop.f32.mrf.mxu0
    %v1736 = vadd.f32 %v1695, %v1735
    %v1737 = vpop.f32.mrf.mxu0
    %v1738 = vpop.f32.mrf.mxu0
    %v1739 = vadd.f32 %v1698, %v1738
    %v1740 = vpop.f32.mrf.mxu0
    %1741 = vdwg.mxu0
    %1742 = vmatprep.subr.bf16.mxu0 0
    %1743 = vmatpush1.bf16.msra.mxu0 %v1350
    %1744 = vmatprep.subr.bf16.mxu0 0
    %1745 = vmatpush1.bf16.msra.mxu0 %v1349
    %1746 = vmatprep.subr.bf16.mxu0 0
    %1747 = vmatpush1.bf16.msra.mxu0 %v1348
    %1748 = vmatprep.subr.bf16.mxu0 0
    %1749 = vmatpush1.bf16.msra.mxu0 %v1347
    %1750 = vmatprep.subr.bf16.mxu0 0
    %1751 = vmatpush1.bf16.msra.mxu0 %v1346
    %1752 = vmatprep.subr.bf16.mxu0 0
    %1753 = vmatpush1.bf16.msra.mxu0 %v1345
    %1754 = vmatprep.subr.bf16.mxu0 0
    %1755 = vmatpush1.bf16.msra.mxu0 %v1344
    %1756 = vmatprep.subr.bf16.mxu0 0
    %1757 = vmatpush1.bf16.msra.mxu0 %v1343
    %1758 = vmatprep.subr.bf16.mxu0 0
    %1759 = vmatpush2.bf16.msra.mxu0 %v1358
    %1760 = vmatprep.subr.bf16.mxu0 0
    %1761 = vmatpush2.bf16.msra.mxu0 %v1357
    %1762 = vmatprep.subr.bf16.mxu0 0
    %1763 = vmatpush2.bf16.msra.mxu0 %v1356
    %1764 = vmatprep.subr.bf16.mxu0 0
    %1765 = vmatpush2.bf16.msra.mxu0 %v1355
    %1766 = vmatprep.subr.bf16.mxu0 0
    %1767 = vmatpush2.bf16.msra.mxu0 %v1354
    %1768 = vmatprep.subr.bf16.mxu0 0
    %1769 = vmatpush2.bf16.msra.mxu0 %v1353
    %1770 = vmatprep.subr.bf16.mxu0 0
    %1771 = vmatpush2.bf16.msra.mxu0 %v1352
    %1772 = vmatprep.subr.bf16.mxu0 0
    %1773 = vmatpush2.bf16.msra.mxu0 %v1351
    %1774 = vmatprep.mubr.bf16.mxu0 %v1653
    %1775 = vmatmul.mubr.bf16.gmra.mxu0 %v1652
    %v1776 = vpop.f32.mrf.mxu0
    %v1777 = vadd.f32 %v1736, %v1776
    %v1778 = vpop.f32.mrf.mxu0
    %v1779 = vpop.f32.mrf.mxu0
    %v1780 = vadd.f32 %v1739, %v1779
    %v1781 = vpop.f32.mrf.mxu0
    %1782 = vdwg.mxu0
    %v1783 = vpack.c.bf16 %v1780, %v1777
    %v1784 = vpack.c.bf16 %v1182, %v1181
    %v1785 = vpack.c.bf16 %v1184, %v1183
    %v1786 = vpack.c.bf16 %v1186, %v1185
    %v1787 = vpack.c.bf16 %v1188, %v1187
    %v1788 = vpack.c.bf16 %v1190, %v1189
    %v1789 = vpack.c.bf16 %v1192, %v1191
    %v1790 = vpack.c.bf16 %v1194, %v1193
    %v1791 = vpack.c.bf16 %v1196, %v1195
    %1792 = vmatprep.subr.bf16.mxu0 0
    %1793 = vmatpush1.bf16.msra.mxu0 %v1791
    %1794 = vmatprep.subr.bf16.mxu0 0
    %1795 = vmatpush1.bf16.msra.mxu0 %v1790
    %1796 = vmatprep.subr.bf16.mxu0 0
    %1797 = vmatpush1.bf16.msra.mxu0 %v1789
    %1798 = vmatprep.subr.bf16.mxu0 0
    %1799 = vmatpush1.bf16.msra.mxu0 %v1788
    %1800 = vmatprep.subr.bf16.mxu0 0
    %1801 = vmatpush1.bf16.msra.mxu0 %v1787
    %1802 = vmatprep.subr.bf16.mxu0 0
    %1803 = vmatpush1.bf16.msra.mxu0 %v1786
    %1804 = vmatprep.subr.bf16.mxu0 0
    %1805 = vmatpush1.bf16.msra.mxu0 %v1785
    %1806 = vmatprep.subr.bf16.mxu0 0
    %1807 = vmatpush1.bf16.msra.mxu0 %v1784
    %1808 = vmatprep.subr.bf16.mxu0 0
    %1809 = vmatpush2.bf16.msra.mxu0 0
    %1810 = vmatprep.subr.bf16.mxu0 0
    %1811 = vmatpush2.bf16.msra.mxu0 0
    %1812 = vmatprep.subr.bf16.mxu0 0
    %1813 = vmatpush2.bf16.msra.mxu0 0
    %1814 = vmatprep.subr.bf16.mxu0 0
    %1815 = vmatpush2.bf16.msra.mxu0 0
    %1816 = vmatprep.subr.bf16.mxu0 0
    %1817 = vmatpush2.bf16.msra.mxu0 0
    %1818 = vmatprep.subr.bf16.mxu0 0
    %1819 = vmatpush2.bf16.msra.mxu0 0
    %1820 = vmatprep.subr.bf16.mxu0 0
    %1821 = vmatpush2.bf16.msra.mxu0 0
    %1822 = vmatprep.subr.bf16.mxu0 0
    %1823 = vmatpush2.bf16.msra.mxu0 0
    %1824 = vmatprep.mubr.bf16.mxu0 0
    %1825 = vmatmul.mubr.bf16.gmra.mxu0 %v1783
    %v1826 = vpop.f32.mrf.mxu0
    %v1827 = vadd.f32 0.0, %v1826
    %v1828 = vpop.f32.mrf.mxu0
    %v1829 = vpop.f32.mrf.mxu0
    %v1830 = vadd.f32 0.0, %v1829
    %v1831 = vpop.f32.mrf.mxu0
    %1832 = vdwg.mxu0
    %v1833 = vrot.slane %v1827, 4
    %v1834 = vadd.f32 %v1827, %v1833
    %v1835 = vrot.slane %v1834, 2
    %v1836 = vadd.f32 %v1834, %v1835
    %v1837 = vrot.slane %v1836, 1
    %v1838 = vadd.f32 %v1836, %v1837
    %v1839 = vrcp.pop 8.0
    %v1840 = vmul.f32 %v1838, %v1839
    %v1841 = vrot.slane %v1830, 4
    %v1842 = vadd.f32 %v1830, %v1841
    %v1843 = vrot.slane %v1842, 2
    %v1844 = vadd.f32 %v1842, %v1843
    %v1845 = vrot.slane %v1844, 1
    %v1846 = vadd.f32 %v1844, %v1845
    %v1847 = vmul.f32 %v1846, %v1839
    %v1848 = vsub.f32 %v1827, %v1840
    %v1849 = vmul.f32 %v1848, %v1848
    %v1850 = vrot.slane %v1849, 4
    %v1851 = vadd.f32 %v1849, %v1850
    %v1852 = vrot.slane %v1851, 2
    %v1853 = vadd.f32 %v1851, %v1852
    %v1854 = vrot.slane %v1853, 1
    %v1855 = vadd.f32 %v1853, %v1854
    %v1856 = vmul.f32 %v1855, %v1839
    %v1857 = vsub.f32 %v1830, %v1847
    %v1858 = vmul.f32 %v1857, %v1857
    %v1859 = vrot.slane %v1858, 4
    %v1860 = vadd.f32 %v1858, %v1859
    %v1861 = vrot.slane %v1860, 2
    %v1862 = vadd.f32 %v1860, %v1861
    %v1863 = vrot.slane %v1862, 1
    %v1864 = vadd.f32 %v1862, %v1863
    %v1865 = vmul.f32 %v1864, %v1839
    %v1866 = vlaneseq
    %v1867 = vshrl.u32 %v1866, 7
    %v1868 = vadd.s32 %v1867, 8
    %vm1869 = vcmp.ge.s32.totalorder %v1867, 8
    %vm1870 = vcmp.ge.s32.totalorder %v1868, 8
    %v1871 = vsel %vm1869, 1, 0
    %v1872 = vsel %vm1870, 1, 0
    %vm1873 = vcmp.eq.s32.totalorder %v1871, 1
    %vm1874 = vcmp.eq.s32.totalorder %v1872, 1
    %v1875 = vsel %vm1873, %v1847, %v1840
    %v1876 = vsel %vm1874, %v1847, %v1840
    %v1877 = vadd.f32 %v1865, 1e-05
    %v1878 = vrsqrt.pop %v1877
    %v1879 = vadd.f32 %v1856, 1e-05
    %v1880 = vrsqrt.pop %v1879
    %v1881 = vsel %vm1873, %v1878, %v1880
    %v1882 = vsel %vm1874, %v1878, %v1880
    %v1883 = vsub.f32 %v1827, %v1875
    %v1884 = vsub.f32 %v1830, %v1876
    %v1885 = vmul.f32 %v1883, %v1881
    %v1886 = vmul.f32 %v1884, %v1882
    %v1888 = vlaneseq
    %v1889 = vshrl.u32 %v1888, 7
    %v1890 = vsub.s32 0, %v1889
    %v1891 = vrot.slane %v1197, %v1890
    %v1893 = vmul.f32 %v1885, %v1891
    %v1894 = vmul.f32 %v1886, %v1891
    %v1896 = vlaneseq
    %v1897 = vshrl.u32 %v1896, 7
    %v1898 = vsub.s32 0, %v1897
    %v1899 = vrot.slane %v1198, %v1898
    %v1901 = vadd.f32 %v1893, %v1899
    %v1902 = vadd.f32 %v1894, %v1899
    %v1903 = vmax.f32 %v1901, 0.0
    %v1904 = vmax.f32 %v1902, 0.0
    %v1905 = vpack.c.bf16 %v1904, %v1903
    %v1906 = vpack.c.bf16 %v1200, %v1199
    %v1907 = vpack.c.bf16 %v1202, %v1201
    %v1908 = vpack.c.bf16 %v1204, %v1203
    %v1909 = vpack.c.bf16 %v1206, %v1205
    %v1910 = vpack.c.bf16 %v1208, %v1207
    %v1911 = vpack.c.bf16 %v1210, %v1209
    %v1912 = vpack.c.bf16 %v1212, %v1211
    %v1913 = vpack.c.bf16 %v1214, %v1213
    %1914 = vmatprep.subr.bf16.mxu0 0
    %1915 = vmatpush1.bf16.msra.mxu0 %v1913
    %1916 = vmatprep.subr.bf16.mxu0 0
    %1917 = vmatpush1.bf16.msra.mxu0 %v1912
    %1918 = vmatprep.subr.bf16.mxu0 0
    %1919 = vmatpush1.bf16.msra.mxu0 %v1911
    %1920 = vmatprep.subr.bf16.mxu0 0
    %1921 = vmatpush1.bf16.msra.mxu0 %v1910
    %1922 = vmatprep.subr.bf16.mxu0 0
    %1923 = vmatpush1.bf16.msra.mxu0 %v1909
    %1924 = vmatprep.subr.bf16.mxu0 0
    %1925 = vmatpush1.bf16.msra.mxu0 %v1908
    %1926 = vmatprep.subr.bf16.mxu0 0
    %1927 = vmatpush1.bf16.msra.mxu0 %v1907
    %1928 = vmatprep.subr.bf16.mxu0 0
    %1929 = vmatpush1.bf16.msra.mxu0 %v1906
    %1930 = vmatprep.subr.bf16.mxu0 0
    %1931 = vmatpush2.bf16.msra.mxu0 0
    %1932 = vmatprep.subr.bf16.mxu0 0
    %1933 = vmatpush2.bf16.msra.mxu0 0
    %1934 = vmatprep.subr.bf16.mxu0 0
    %1935 = vmatpush2.bf16.msra.mxu0 0
    %1936 = vmatprep.subr.bf16.mxu0 0
    %1937 = vmatpush2.bf16.msra.mxu0 0
    %1938 = vmatprep.subr.bf16.mxu0 0
    %1939 = vmatpush2.bf16.msra.mxu0 0
    %1940 = vmatprep.subr.bf16.mxu0 0
    %1941 = vmatpush2.bf16.msra.mxu0 0
    %1942 = vmatprep.subr.bf16.mxu0 0
    %1943 = vmatpush2.bf16.msra.mxu0 0
    %1944 = vmatprep.subr.bf16.mxu0 0
    %1945 = vmatpush2.bf16.msra.mxu0 0
    %1946 = vmatprep.mubr.bf16.mxu0 0
    %1947 = vmatmul.mubr.bf16.gmra.mxu0 %v1905
    %v1948 = vpop.f32.mrf.mxu0
    %v1949 = vadd.f32 0.0, %v1948
    %v1950 = vpop.f32.mrf.mxu0
    %v1951 = vpop.f32.mrf.mxu0
    %v1952 = vadd.f32 0.0, %v1951
    %v1953 = vpop.f32.mrf.mxu0
    %1954 = vdwg.mxu0
    %v1955 = vrot.slane %v1949, 4
    %v1956 = vadd.f32 %v1949, %v1955
    %v1957 = vrot.slane %v1956, 2
    %v1958 = vadd.f32 %v1956, %v1957
    %v1959 = vrot.slane %v1958, 1
    %v1960 = vadd.f32 %v1958, %v1959
    %v1961 = vmul.f32 %v1960, %v1839
    %v1962 = vrot.slane %v1952, 4
    %v1963 = vadd.f32 %v1952, %v1962
    %v1964 = vrot.slane %v1963, 2
    %v1965 = vadd.f32 %v1963, %v1964
    %v1966 = vrot.slane %v1965, 1
    %v1967 = vadd.f32 %v1965, %v1966
    %v1968 = vmul.f32 %v1967, %v1839
    %v1969 = vsub.f32 %v1949, %v1961
    %v1970 = vmul.f32 %v1969, %v1969
    %v1971 = vrot.slane %v1970, 4
    %v1972 = vadd.f32 %v1970, %v1971
    %v1973 = vrot.slane %v1972, 2
    %v1974 = vadd.f32 %v1972, %v1973
    %v1975 = vrot.slane %v1974, 1
    %v1976 = vadd.f32 %v1974, %v1975
    %v1977 = vmul.f32 %v1976, %v1839
    %v1978 = vsub.f32 %v1952, %v1968
    %v1979 = vmul.f32 %v1978, %v1978
    %v1980 = vrot.slane %v1979, 4
    %v1981 = vadd.f32 %v1979, %v1980
    %v1982 = vrot.slane %v1981, 2
    %v1983 = vadd.f32 %v1981, %v1982
    %v1984 = vrot.slane %v1983, 1
    %v1985 = vadd.f32 %v1983, %v1984
    %v1986 = vmul.f32 %v1985, %v1839
    %v1987 = vsel %vm1873, %v1968, %v1961
    %v1988 = vsel %vm1874, %v1968, %v1961
    %v1989 = vadd.f32 %v1986, 1e-05
    %v1990 = vrsqrt.pop %v1989
    %v1991 = vadd.f32 %v1977, 1e-05
    %v1992 = vrsqrt.pop %v1991
    %v1993 = vsel %vm1873, %v1990, %v1992
    %v1994 = vsel %vm1874, %v1990, %v1992
    %v1995 = vsub.f32 %v1949, %v1987
    %v1996 = vsub.f32 %v1952, %v1988
    %v1997 = vmul.f32 %v1995, %v1993
    %v1998 = vmul.f32 %v1996, %v1994
    %v1999 = vld [vmem:[#allocation10] sm:$0xff]
    %v2000 = vld [vmem:[#allocation10 + $0x8] sm:$0xff]
    %v2001 = vld [vmem:[#allocation10 + $0x10] sm:$0xff]
    %v2002 = vld [vmem:[#allocation10 + $0x18] sm:$0xff]
    %v2003 = vld [vmem:[#allocation10 + $0x20] sm:$0xff]
    %v2004 = vld [vmem:[#allocation10 + $0x28] sm:$0xff]
    %v2005 = vld [vmem:[#allocation10 + $0x30] sm:$0xff]
    %v2006 = vld [vmem:[#allocation10 + $0x38] sm:$0xff]
    %v2007 = vld [vmem:[#allocation10 + $0x40] sm:$0xff]
    %v2008 = vld [vmem:[#allocation10 + $0x48] sm:$0xff]
    %v2009 = vld [vmem:[#allocation10 + $0x50] sm:$0xff]
    %v2010 = vld [vmem:[#allocation10 + $0x58] sm:$0xff]
    %v2011 = vld [vmem:[#allocation10 + $0x60] sm:$0xff]
    %v2012 = vld [vmem:[#allocation10 + $0x68] sm:$0xff]
    %v2013 = vld [vmem:[#allocation10 + $0x70] sm:$0xff]
    %v2014 = vld [vmem:[#allocation10 + $0x78] sm:$0xff]
    %v2015 = vpack.c.bf16 %v1998, %v1997
    %v2016 = vpack.c.bf16 %v2000, %v1999
    %v2017 = vpack.c.bf16 %v2002, %v2001
    %v2018 = vpack.c.bf16 %v2004, %v2003
    %v2019 = vpack.c.bf16 %v2006, %v2005
    %v2020 = vpack.c.bf16 %v2008, %v2007
    %v2021 = vpack.c.bf16 %v2010, %v2009
    %v2022 = vpack.c.bf16 %v2012, %v2011
    %v2023 = vpack.c.bf16 %v2014, %v2013
    %2024 = vmatprep.subr.bf16.mxu0 0
    %2025 = vmatpush1.bf16.msra.mxu0 %v2023
    %2026 = vmatprep.subr.bf16.mxu0 0
    %2027 = vmatpush1.bf16.msra.mxu0 %v2022
    %2028 = vmatprep.subr.bf16.mxu0 0
    %2029 = vmatpush1.bf16.msra.mxu0 %v2021
    %2030 = vmatprep.subr.bf16.mxu0 0
    %2031 = vmatpush1.bf16.msra.mxu0 %v2020
    %2032 = vmatprep.subr.bf16.mxu0 0
    %2033 = vmatpush1.bf16.msra.mxu0 %v2019
    %2034 = vmatprep.subr.bf16.mxu0 0
    %2035 = vmatpush1.bf16.msra.mxu0 %v2018
    %2036 = vmatprep.subr.bf16.mxu0 0
    %2037 = vmatpush1.bf16.msra.mxu0 %v2017
    %2038 = vmatprep.subr.bf16.mxu0 0
    %2039 = vmatpush1.bf16.msra.mxu0 %v2016
    %2040 = vmatprep.subr.bf16.mxu0 0
    %2041 = vmatpush2.bf16.msra.mxu0 0
    %2042 = vmatprep.subr.bf16.mxu0 0
    %2043 = vmatpush2.bf16.msra.mxu0 0
    %2044 = vmatprep.subr.bf16.mxu0 0
    %2045 = vmatpush2.bf16.msra.mxu0 0
    %2046 = vmatprep.subr.bf16.mxu0 0
    %2047 = vmatpush2.bf16.msra.mxu0 0
    %2048 = vmatprep.subr.bf16.mxu0 0
    %2049 = vmatpush2.bf16.msra.mxu0 0
    %2050 = vmatprep.subr.bf16.mxu0 0
    %2051 = vmatpush2.bf16.msra.mxu0 0
    %2052 = vmatprep.subr.bf16.mxu0 0
    %2053 = vmatpush2.bf16.msra.mxu0 0
    %2054 = vmatprep.subr.bf16.mxu0 0
    %2055 = vmatpush2.bf16.msra.mxu0 0
    %2056 = vmatprep.mubr.bf16.mxu0 0
    %2057 = vmatmul.mubr.bf16.gmra.mxu0 %v2015
    %v2058 = vpop.f32.mrf.mxu0
    %v2059 = vadd.f32 0.0, %v2058
    %v2060 = vpop.f32.mrf.mxu0
    %v2061 = vpop.f32.mrf.mxu0
    %v2062 = vadd.f32 0.0, %v2061
    %v2063 = vpop.f32.mrf.mxu0
    %2064 = vdwg.mxu0
    %v2065 = vld [vmem:[%s8] sm:$0x1]
    %v2066 = vld [vmem:[%s9] sm:$0x1]
    %v2067 = vrot.slane %v2059, 4
    %v2068 = vadd.f32 %v2059, %v2067
    %v2069 = vrot.slane %v2068, 2
    %v2070 = vadd.f32 %v2068, %v2069
    %v2071 = vrot.slane %v2070, 1
    %v2072 = vadd.f32 %v2070, %v2071
    %v2073 = vmul.f32 %v2072, %v1839
    %v2074 = vrot.slane %v2062, 4
    %v2075 = vadd.f32 %v2062, %v2074
    %v2076 = vrot.slane %v2075, 2
    %v2077 = vadd.f32 %v2075, %v2076
    %v2078 = vrot.slane %v2077, 1
    %v2079 = vadd.f32 %v2077, %v2078
    %v2080 = vmul.f32 %v2079, %v1839
    %v2081 = vsub.f32 %v2059, %v2073
    %v2082 = vmul.f32 %v2081, %v2081
    %v2083 = vrot.slane %v2082, 4
    %v2084 = vadd.f32 %v2082, %v2083
    %v2085 = vrot.slane %v2084, 2
    %v2086 = vadd.f32 %v2084, %v2085
    %v2087 = vrot.slane %v2086, 1
    %v2088 = vadd.f32 %v2086, %v2087
    %v2089 = vmul.f32 %v2088, %v1839
    %v2090 = vsub.f32 %v2062, %v2080
    %v2091 = vmul.f32 %v2090, %v2090
    %v2092 = vrot.slane %v2091, 4
    %v2093 = vadd.f32 %v2091, %v2092
    %v2094 = vrot.slane %v2093, 2
    %v2095 = vadd.f32 %v2093, %v2094
    %v2096 = vrot.slane %v2095, 1
    %v2097 = vadd.f32 %v2095, %v2096
    %v2098 = vmul.f32 %v2097, %v1839
    %v2099 = vsel %vm1873, %v2080, %v2073
    %v2100 = vsel %vm1874, %v2080, %v2073
    %v2101 = vadd.f32 %v2098, 1e-05
    %v2102 = vrsqrt.pop %v2101
    %v2103 = vadd.f32 %v2089, 1e-05
    %v2104 = vrsqrt.pop %v2103
    %v2105 = vsel %vm1873, %v2102, %v2104
    %v2106 = vsel %vm1874, %v2102, %v2104
    %v2107 = vsub.f32 %v2059, %v2099
    %v2108 = vsub.f32 %v2062, %v2100
    %v2109 = vmul.f32 %v2107, %v2105
    %v2110 = vmul.f32 %v2108, %v2106
    %v2112 = vlaneseq
    %v2113 = vshrl.u32 %v2112, 7
    %v2114 = vsub.s32 0, %v2113
    %v2115 = vrot.slane %v2065, %v2114
    %v2117 = vmul.f32 %v2109, %v2115
    %v2118 = vmul.f32 %v2110, %v2115
    %v2120 = vlaneseq
    %v2121 = vshrl.u32 %v2120, 7
    %v2122 = vsub.s32 0, %v2121
    %v2123 = vrot.slane %v2066, %v2122
    %v2125 = vadd.f32 %v2117, %v2123
    %v2126 = vadd.f32 %v2118, %v2123
    %v2127 = vmax.f32 %v2125, 0.0
    %v2128 = vmax.f32 %v2126, 0.0
    %v2129 = vld [vmem:[#allocation11] sm:$0xff]
    %v2130 = vld [vmem:[#allocation11 + $0x8] sm:$0xff]
    %v2131 = vld [vmem:[#allocation11 + $0x10] sm:$0xff]
    %v2132 = vld [vmem:[#allocation11 + $0x18] sm:$0xff]
    %v2133 = vld [vmem:[#allocation11 + $0x20] sm:$0xff]
    %v2134 = vld [vmem:[#allocation11 + $0x28] sm:$0xff]
    %v2135 = vld [vmem:[#allocation11 + $0x30] sm:$0xff]
    %v2136 = vld [vmem:[#allocation11 + $0x38] sm:$0xff]
    %v2137 = vld [vmem:[#allocation11 + $0x40] sm:$0xff]
    %v2138 = vld [vmem:[#allocation11 + $0x48] sm:$0xff]
    %v2139 = vld [vmem:[#allocation11 + $0x50] sm:$0xff]
    %v2140 = vld [vmem:[#allocation11 + $0x58] sm:$0xff]
    %v2141 = vld [vmem:[#allocation11 + $0x60] sm:$0xff]
    %v2142 = vld [vmem:[#allocation11 + $0x68] sm:$0xff]
    %v2143 = vld [vmem:[#allocation11 + $0x70] sm:$0xff]
    %v2144 = vld [vmem:[#allocation11 + $0x78] sm:$0xff]
    %v2145 = vpack.c.bf16 %v2128, %v2127
    %v2146 = vpack.c.bf16 %v2130, %v2129
    %v2147 = vpack.c.bf16 %v2132, %v2131
    %v2148 = vpack.c.bf16 %v2134, %v2133
    %v2149 = vpack.c.bf16 %v2136, %v2135
    %v2150 = vpack.c.bf16 %v2138, %v2137
    %v2151 = vpack.c.bf16 %v2140, %v2139
    %v2152 = vpack.c.bf16 %v2142, %v2141
    %v2153 = vpack.c.bf16 %v2144, %v2143
    %2154 = vmatprep.subr.bf16.mxu0 0
    %2155 = vmatpush1.bf16.msra.mxu0 %v2153
    %2156 = vmatprep.subr.bf16.mxu0 0
    %2157 = vmatpush1.bf16.msra.mxu0 %v2152
    %2158 = vmatprep.subr.bf16.mxu0 0
    %2159 = vmatpush1.bf16.msra.mxu0 %v2151
    %2160 = vmatprep.subr.bf16.mxu0 0
    %2161 = vmatpush1.bf16.msra.mxu0 %v2150
    %2162 = vmatprep.subr.bf16.mxu0 0
    %2163 = vmatpush1.bf16.msra.mxu0 %v2149
    %2164 = vmatprep.subr.bf16.mxu0 0
    %2165 = vmatpush1.bf16.msra.mxu0 %v2148
    %2166 = vmatprep.subr.bf16.mxu0 0
    %2167 = vmatpush1.bf16.msra.mxu0 %v2147
    %2168 = vmatprep.subr.bf16.mxu0 0
    %2169 = vmatpush1.bf16.msra.mxu0 %v2146
    %2170 = vmatprep.subr.bf16.mxu0 0
    %2171 = vmatpush2.bf16.msra.mxu0 0
    %2172 = vmatprep.subr.bf16.mxu0 0
    %2173 = vmatpush2.bf16.msra.mxu0 0
    %2174 = vmatprep.subr.bf16.mxu0 0
    %2175 = vmatpush2.bf16.msra.mxu0 0
    %2176 = vmatprep.subr.bf16.mxu0 0
    %2177 = vmatpush2.bf16.msra.mxu0 0
    %2178 = vmatprep.subr.bf16.mxu0 0
    %2179 = vmatpush2.bf16.msra.mxu0 0
    %2180 = vmatprep.subr.bf16.mxu0 0
    %2181 = vmatpush2.bf16.msra.mxu0 0
    %2182 = vmatprep.subr.bf16.mxu0 0
    %2183 = vmatpush2.bf16.msra.mxu0 0
    %2184 = vmatprep.subr.bf16.mxu0 0
    %2185 = vmatpush2.bf16.msra.mxu0 0
    %2186 = vmatprep.mubr.bf16.mxu0 0
    %2187 = vmatmul.mubr.bf16.gmra.mxu0 %v2145
    %v2188 = vpop.f32.mrf.mxu0
    %v2189 = vadd.f32 0.0, %v2188
    %v2190 = vpop.f32.mrf.mxu0
    %v2191 = vpop.f32.mrf.mxu0
    %v2192 = vadd.f32 0.0, %v2191
    %v2193 = vpop.f32.mrf.mxu0
    %2194 = vdwg.mxu0
    %2195 = vst [vmem:[#allocation13] sm:$0xff] %v2189
    %2196 = vst [vmem:[#allocation13 + $0x8] sm:$0xff] %v2192
    // Predicated region
    $region70: #{tpu_custom_call.1} parent=1 // pred_check
      _
    $region71: #{tpu_custom_call.1} parent=1 // pred_check_branch
      %2198 = sbr.rel (0) target = $region73
    $region72: #{tpu_custom_call.1} parent=1 // pred_region
      %s2200 = ssub.s32 256, 256
      %2201 = vsyncadd [#allocation4], %s2200
      %s2202 = sshll.u32 [#allocation13], 4
      %s2203 = int_to_ptr.vmem [resolvable:$true] %s2202
      %2208 = dma.vmem_to_hbm [thread:$0]  %s2203, 256, %s11, [#allocation4], 128, 128, 8
    $region73: #{tpu_custom_call.1} parent=1 // pred_fallthru
      _
    // Predicated region
    $region74: #{tpu_custom_call.1} parent=1 // pred_check
      _
    $region75: #{tpu_custom_call.1} parent=1 // pred_check_branch
      %2210 = sbr.rel (0) target = $region77
    $region76: #{tpu_custom_call.1} parent=1 // pred_region
      %2211 = dma.done [#allocation4], 256
    $region77: #{tpu_custom_call.1} parent=1 // pred_fallthru
      _
    %2212 = vsyncpa [#allocation3], 1
    %2213 = vsyncpa [#allocation6], 1
    %2214 = vsyncpa [#allocation9], 1
    %2215 = vsyncpa [#allocation12], 1
    %2216 = vsyncpa [#allocation4], 1

</llo_original>
